<compile_context>
chip_gen: v7x
topology: tpu7x:2x2x1
jax: 0.10.0
libtpu: 0.0.40
codegen_flags: <defaults>
</compile_context>

<pallas_src>
import jax
import jax.numpy as jnp
from jax.experimental import pallas as pl
from jax.experimental.pallas import tpu as pltpu

BN_EPS = 1e-5
LANES = 128


def _round_up(x, m):
    return (x + m - 1) // m * m


# ----------------------------------------------------------------------------
# Pallas kernels
# ----------------------------------------------------------------------------
def _conv_bn_relu_pool_kernel(p_ref, w_ref, b_ref, o_ref):
    """Fused conv-as-matmul + folded-BN shift + ReLU + 2x2 max-pool.

    grid = (row_tiles, 4); axis 1 ("arbitrary") iterates the four pool taps.
      p_ref: (1, tm, Kp) bf16  im2col rows for pool tap t, row block i
      w_ref: (Kp, 128)   bf16  weights with BN scale folded in (lane-padded)
      b_ref: (1, 128)    f32   per-channel shift = (bias - mean)*scale + beta
      o_ref: (tm, 128)   f32   pooled output block, resident across the t axis
    """
    t = pl.program_id(1)
    acc = jnp.dot(p_ref[0], w_ref[...], preferred_element_type=jnp.float32)
    y = jnp.maximum(acc + b_ref[...], 0.0)

    @pl.when(t == 0)
    def _():
        o_ref[...] = y

    @pl.when(t > 0)
    def _():
        o_ref[...] = jnp.maximum(o_ref[...], y)


def _matmul_bias_kernel(x_ref, w_ref, b_ref, o_ref):
    """Lane-dense (M, K) @ (K, 128) + bias for the final FC layer."""
    acc = jnp.dot(x_ref[...], w_ref[...], preferred_element_type=jnp.float32)
    o_ref[...] = acc + b_ref[...]


# ----------------------------------------------------------------------------
# Wrappers around pallas_call
# ----------------------------------------------------------------------------
def _pick_row_tile(npool, max_tile=512):
    """Largest power-of-two tile (>=8) that leaves >=2 row tiles after padding."""
    tm = max_tile
    while tm > 8 and _round_up(npool, tm) // tm < 2:
        tm //= 2
    return tm, _round_up(npool, tm)


def conv_bn_relu_pool(x_nhwc, w_oihw, b_conv, gamma, beta, mean, var):
    """One block: Conv2d(k=5, pad=2) + BatchNorm (eval) + ReLU + MaxPool2d(2).

    JAX glue builds bf16 im2col rows grouped by pool tap (strided slices only);
    the matmul + shift + ReLU + pool-max runs in a single Pallas kernel.
    """
    b, h, w, cin = x_nhwc.shape
    cout = w_oihw.shape[0]
    h2, w2 = h // 2, w // 2
    npool = b * h2 * w2
    k = 25 * cin
    kp = _round_up(k, LANES)
    tm, npad = _pick_row_tile(npool)
    n_tiles = npad // tm

    # ---- im2col grouped by 2x2 pool tap (bf16, no big transposes) -----------
    xb = x_nhwc.astype(jnp.bfloat16)
    xp = jnp.pad(xb, ((0, 0), (2, 3), (2, 3), (0, 0)))
    groups = []
    for py in range(2):
        for px in range(2):
            taps = []
            for dh in range(5):
                for dw in range(5):
                    taps.append(
                        xp[:, py + dh: py + dh + h: 2,
                               px + dw: px + dw + w: 2, :])   # (B, H2, W2, Cin)
            g = jnp.stack(taps, axis=3)                        # (B, H2, W2, 25, Cin)
            groups.append(g.reshape(npool, k))
    patches = jnp.stack(groups, axis=0)                        # (4, Npool, K)
    patches = jnp.pad(patches, ((0, 0), (0, npad - npool), (0, kp - k)))

    # ---- fold BN (eval mode) into weights / shift ----------------------------
    s = gamma / jnp.sqrt(var + BN_EPS)                         # (Cout,)
    shift = (b_conv - mean) * s + beta                         # (Cout,)
    # PyTorch weight (Cout, Cin, KH, KW) -> (KH*KW*Cin, Cout), tap = dh*5+dw.
    wf = jnp.transpose(w_oihw, (2, 3, 1, 0)).reshape(k, cout) * s[None, :]
    wf = jnp.pad(wf, ((0, kp - k), (0, LANES - cout))).astype(jnp.bfloat16)
    shift = jnp.pad(shift, (0, LANES - cout)).reshape(1, LANES).astype(jnp.float32)

    out = pl.pallas_call(
        _conv_bn_relu_pool_kernel,
        out_shape=jax.ShapeDtypeStruct((npad, LANES), jnp.float32),
        grid=(n_tiles, 4),
        in_specs=[
            pl.BlockSpec((1, tm, kp), lambda i, t: (t, i, 0)),
            pl.BlockSpec((kp, LANES), lambda i, t: (0, 0)),
            pl.BlockSpec((1, LANES), lambda i, t: (0, 0)),
        ],
        out_specs=pl.BlockSpec((tm, LANES), lambda i, t: (i, 0)),
        compiler_params=pltpu.CompilerParams(
            dimension_semantics=("parallel", "arbitrary")),
    )(patches, wf, shift)

    return out[:npool, :cout].reshape(b, h2, w2, cout)


def fc(feat, wfc, bfc):
    """Linear 1568 -> 10, padded to an (8, K) x (K, 128) lane-dense matmul.

    This layer is negligible; grid=(1,) is intentional (review: plain XLA would
    be equally fine here).
    """
    b, k = feat.shape
    n = wfc.shape[0]
    mp = _round_up(max(b, 8), 8)
    xb = jnp.pad(feat, ((0, mp - b), (0, 0))).astype(jnp.bfloat16)
    wt = jnp.pad(wfc.T, ((0, 0), (0, LANES - n))).astype(jnp.bfloat16)
    bb = jnp.pad(bfc, (0, LANES - n)).reshape(1, LANES).astype(jnp.float32)
    out = pl.pallas_call(
        _matmul_bias_kernel,
        out_shape=jax.ShapeDtypeStruct((mp, LANES), jnp.float32),
        grid=(1,),
        in_specs=[
            pl.BlockSpec((mp, k), lambda i: (0, 0)),
            pl.BlockSpec((k, LANES), lambda i: (0, 0)),
            pl.BlockSpec((1, LANES), lambda i: (0, 0)),
        ],
        out_specs=pl.BlockSpec((mp, LANES), lambda i: (0, 0)),
    )(xb, wt, bb)
    return out[:b, :n]


# ----------------------------------------------------------------------------
# Model forward (NCHW in, logits out) — matches the PyTorch module in eval mode
# ----------------------------------------------------------------------------
def cnn_forward(x_nchw, params):
    b = x_nchw.shape[0]
    x = jnp.transpose(x_nchw, (0, 2, 3, 1)).astype(jnp.float32)   # NCHW -> NHWC
    # layer1: Conv(1->16, 5, pad=2) + BN + ReLU + MaxPool2   -> (B, 14, 14, 16)
    y = conv_bn_relu_pool(x, params["w1"], params["b1"], params["g1"],
                          params["beta1"], params["m1"], params["v1"])
    # layer2: Conv(16->32, 5, pad=2) + BN + ReLU + MaxPool2  -> (B, 7, 7, 32)
    y = conv_bn_relu_pool(y, params["w2"], params["b2"], params["g2"],
                          params["beta2"], params["m2"], params["v2"])
    # flatten exactly like torch's out.view(B, -1) on NCHW: order (C, H, W)
    feat = jnp.transpose(y, (0, 3, 1, 2)).reshape(b, 32 * 7 * 7)
    return fc(feat, params["wfc"], params["bfc"])


# ----------------------------------------------------------------------------
# Deterministic parameter init (synthetic; no checkpoint load)
# ----------------------------------------------------------------------------
def init_params(key):
    ks = jax.random.split(key, 16)
    p = {}
    # layer1 conv + BN
    p["w1"] = jax.random.normal(ks[0], (16, 1, 5, 5), jnp.float32) * 0.1
    p["b1"] = jax.random.normal(ks[1], (16,), jnp.float32) * 0.1
    p["g1"] = 1.0 + 0.1 * jax.random.normal(ks[2], (16,), jnp.float32)
    p["beta1"] = 0.1 * jax.random.normal(ks[3], (16,), jnp.float32)
    p["m1"] = 0.1 * jax.random.normal(ks[4], (16,), jnp.float32)
    p["v1"] = jax.random.uniform(ks[5], (16,), jnp.float32, 0.5, 1.5)
    # layer2 conv + BN
    p["w2"] = jax.random.normal(ks[6], (32, 16, 5, 5), jnp.float32) * 0.05
    p["b2"] = jax.random.normal(ks[7], (32,), jnp.float32) * 0.1
    p["g2"] = 1.0 + 0.1 * jax.random.normal(ks[8], (32,), jnp.float32)
    p["beta2"] = 0.1 * jax.random.normal(ks[9], (32,), jnp.float32)
    p["m2"] = 0.1 * jax.random.normal(ks[10], (32,), jnp.float32)
    p["v2"] = jax.random.uniform(ks[11], (32,), jnp.float32, 0.5, 1.5)
    # fc
    p["wfc"] = jax.random.normal(ks[12], (10, 7 * 7 * 32), jnp.float32) * 0.02
    p["bfc"] = jax.random.normal(ks[13], (10,), jnp.float32) * 0.1
    return p


if __name__ == "__main__":
    key = jax.random.PRNGKey(0)
    kp, kx = jax.random.split(key)
    params = init_params(kp)
    # MNIST-like input: 28x28 is required so the fc sees 7*7*32 features.
    x = jax.random.normal(kx, (2, 1, 28, 28), jnp.float32)

    fwd = jax.jit(cnn_forward)
    out = fwd(x, params)
    out = jax.block_until_ready(out)

    assert out.shape == (2, 10), out.shape
    assert bool(jnp.all(jnp.isfinite(out)))
    print("KERNEL_OK")
</pallas_src>

<mosaic_0001>
module attributes {stable_mosaic.version = 11 : i64} {
  func.func @_conv_bn_relu_pool_kernel(%arg0: i32, %arg1: i32, %arg2: memref<1x256x128xbf16, #tpu.memory_space<vmem>>, %arg3: memref<128x128xbf16, #tpu.memory_space<vmem>>, %arg4: memref<1x128xf32, #tpu.memory_space<vmem>>, %arg5: memref<256x128xf32, #tpu.memory_space<vmem>>) attributes {dimension_semantics = [#tpu.dimension_semantics<parallel>, #tpu.dimension_semantics<arbitrary>], iteration_bounds = array<i64: 2, 4>, scalar_prefetch = 0 : i64, scratch_operands = 0 : i64, tpu.core_type = #tpu.core_type<tc>, window_params = [{transform_indices = @transform_0, window_bounds = array<i64: 1, 256, 128>}, {pipeline_mode = #tpu.pipeline_mode<synchronous>, transform_indices = @transform_1, window_bounds = array<i64: 128, 128>}, {pipeline_mode = #tpu.pipeline_mode<synchronous>, transform_indices = @transform_2, window_bounds = array<i64: 1, 128>}, {transform_indices = @transform_3, window_bounds = array<i64: 256, 128>}]} {
    %c0 = arith.constant 0 : index
    %c0_0 = arith.constant 0 : index
    %c0_1 = arith.constant 0 : index
    %0 = vector.load %arg2[%c0, %c0_0, %c0_1] : memref<1x256x128xbf16, #tpu.memory_space<vmem>>, vector<1x256x128xbf16>
    %1 = vector.shape_cast %0 : vector<1x256x128xbf16> to vector<256x128xbf16>
    %c0_2 = arith.constant 0 : index
    %c0_3 = arith.constant 0 : index
    %2 = vector.load %arg3[%c0_2, %c0_3] : memref<128x128xbf16, #tpu.memory_space<vmem>>, vector<128x128xbf16>
    %cst = arith.constant dense<0.000000e+00> : vector<256x128xf32>
    %3 = tpu.matmul %1, %2, %cst {dimension_numbers = #tpu.dot_dimension_numbers<[1], [0], [0], [1], [0, 0, 1, 1], [], []>} : vector<256x128xbf16>, vector<128x128xbf16>, vector<256x128xf32> -> vector<256x128xf32>
    %c0_4 = arith.constant 0 : index
    %c0_5 = arith.constant 0 : index
    %4 = vector.load %arg4[%c0_4, %c0_5] : memref<1x128xf32, #tpu.memory_space<vmem>>, vector<1x128xf32>
    %5 = vector.broadcast %4 : vector<1x128xf32> to vector<256x128xf32>
    %6 = arith.addf %3, %5 : vector<256x128xf32>
    %cst_6 = arith.constant 0.000000e+00 : f32
    %7 = vector.broadcast %cst_6 : f32 to vector<256x128xf32>
    %8 = arith.maximumf %6, %7 : vector<256x128xf32>
    %c0_i32 = arith.constant 0 : i32
    %9 = arith.cmpi eq, %arg1, %c0_i32 : i32
    %10 = arith.extui %9 : i1 to i32
    %c0_i32_7 = arith.constant 0 : i32
    %11 = arith.cmpi ne, %10, %c0_i32_7 : i32
    scf.if %11 {
      %c0_10 = arith.constant 0 : index
      %c0_11 = arith.constant 0 : index
      %15 = vector.load %arg5[%c0_10, %c0_11] : memref<256x128xf32, #tpu.memory_space<vmem>>, vector<256x128xf32>
      tpu.vector_store %arg5[%c0_10, %c0_11], %8 {strides = array<i32>} : memref<256x128xf32, #tpu.memory_space<vmem>>, vector<256x128xf32>,
    } else {
    }
    %c0_i32_8 = arith.constant 0 : i32
    %12 = arith.cmpi sgt, %arg1, %c0_i32_8 : i32
    %13 = arith.extui %12 : i1 to i32
    %c0_i32_9 = arith.constant 0 : i32
    %14 = arith.cmpi ne, %13, %c0_i32_9 : i32
    scf.if %14 {
      %c0_10 = arith.constant 0 : index
      %c0_11 = arith.constant 0 : index
      %15 = vector.load %arg5[%c0_10, %c0_11] : memref<256x128xf32, #tpu.memory_space<vmem>>, vector<256x128xf32>
      %16 = arith.maximumf %15, %8 : vector<256x128xf32>
      %c0_12 = arith.constant 0 : index
      %c0_13 = arith.constant 0 : index
      %17 = vector.load %arg5[%c0_12, %c0_13] : memref<256x128xf32, #tpu.memory_space<vmem>>, vector<256x128xf32>
      tpu.vector_store %arg5[%c0_12, %c0_13], %16 {strides = array<i32>} : memref<256x128xf32, #tpu.memory_space<vmem>>, vector<256x128xf32>,
    } else {
    }
    return
  }
  func.func @transform_0(%arg0: i32, %arg1: i32) -> (i32, i32, i32) {
    %c0_i32 = arith.constant 0 : i32
    %c0_i32_0 = arith.constant 0 : i32
    return %arg1, %arg0, %c0_i32 : i32, i32, i32
  }
  func.func @transform_1(%arg0: i32, %arg1: i32) -> (i32, i32) {
    %c0_i32 = arith.constant 0 : i32
    %c0_i32_0 = arith.constant 0 : i32
    %c0_i32_1 = arith.constant 0 : i32
    return %c0_i32, %c0_i32_0 : i32, i32
  }
  func.func @transform_2(%arg0: i32, %arg1: i32) -> (i32, i32) {
    %c0_i32 = arith.constant 0 : i32
    %c0_i32_0 = arith.constant 0 : i32
    %c0_i32_1 = arith.constant 0 : i32
    return %c0_i32, %c0_i32_0 : i32, i32
  }
  func.func @transform_3(%arg0: i32, %arg1: i32) -> (i32, i32) {
    %c0_i32 = arith.constant 0 : i32
    %c0_i32_0 = arith.constant 0 : i32
    return %arg0, %c0_i32 : i32, i32
  }
}

module attributes {stable_mosaic.version = 11 : i64} {
  func.func @_conv_bn_relu_pool_kernel(%arg0: i32, %arg1: i32, %arg2: memref<1x64x512xbf16, #tpu.memory_space<vmem>>, %arg3: memref<512x128xbf16, #tpu.memory_space<vmem>>, %arg4: memref<1x128xf32, #tpu.memory_space<vmem>>, %arg5: memref<64x128xf32, #tpu.memory_space<vmem>>) attributes {dimension_semantics = [#tpu.dimension_semantics<parallel>, #tpu.dimension_semantics<arbitrary>], iteration_bounds = array<i64: 2, 4>, scalar_prefetch = 0 : i64, scratch_operands = 0 : i64, tpu.core_type = #tpu.core_type<tc>, window_params = [{transform_indices = @transform_0, window_bounds = array<i64: 1, 64, 512>}, {pipeline_mode = #tpu.pipeline_mode<synchronous>, transform_indices = @transform_1, window_bounds = array<i64: 512, 128>}, {pipeline_mode = #tpu.pipeline_mode<synchronous>, transform_indices = @transform_2, window_bounds = array<i64: 1, 128>}, {transform_indices = @transform_3, window_bounds = array<i64: 64, 128>}]} {
    %c0 = arith.constant 0 : index
    %c0_0 = arith.constant 0 : index
    %c0_1 = arith.constant 0 : index
    %0 = vector.load %arg2[%c0, %c0_0, %c0_1] : memref<1x64x512xbf16, #tpu.memory_space<vmem>>, vector<1x64x512xbf16>
    %1 = vector.shape_cast %0 : vector<1x64x512xbf16> to vector<64x512xbf16>
    %c0_2 = arith.constant 0 : index
    %c0_3 = arith.constant 0 : index
    %2 = vector.load %arg3[%c0_2, %c0_3] : memref<512x128xbf16, #tpu.memory_space<vmem>>, vector<512x128xbf16>
    %cst = arith.constant dense<0.000000e+00> : vector<64x128xf32>
    %3 = tpu.matmul %1, %2, %cst {dimension_numbers = #tpu.dot_dimension_numbers<[1], [0], [0], [1], [0, 0, 1, 1], [], []>} : vector<64x512xbf16>, vector<512x128xbf16>, vector<64x128xf32> -> vector<64x128xf32>
    %c0_4 = arith.constant 0 : index
    %c0_5 = arith.constant 0 : index
    %4 = vector.load %arg4[%c0_4, %c0_5] : memref<1x128xf32, #tpu.memory_space<vmem>>, vector<1x128xf32>
    %5 = vector.broadcast %4 : vector<1x128xf32> to vector<64x128xf32>
    %6 = arith.addf %3, %5 : vector<64x128xf32>
    %cst_6 = arith.constant 0.000000e+00 : f32
    %7 = vector.broadcast %cst_6 : f32 to vector<64x128xf32>
    %8 = arith.maximumf %6, %7 : vector<64x128xf32>
    %c0_i32 = arith.constant 0 : i32
    %9 = arith.cmpi eq, %arg1, %c0_i32 : i32
    %10 = arith.extui %9 : i1 to i32
    %c0_i32_7 = arith.constant 0 : i32
    %11 = arith.cmpi ne, %10, %c0_i32_7 : i32
    scf.if %11 {
      %c0_10 = arith.constant 0 : index
      %c0_11 = arith.constant 0 : index
      %15 = vector.load %arg5[%c0_10, %c0_11] : memref<64x128xf32, #tpu.memory_space<vmem>>, vector<64x128xf32>
      tpu.vector_store %arg5[%c0_10, %c0_11], %8 {strides = array<i32>} : memref<64x128xf32, #tpu.memory_space<vmem>>, vector<64x128xf32>,
    } else {
    }
    %c0_i32_8 = arith.constant 0 : i32
    %12 = arith.cmpi sgt, %arg1, %c0_i32_8 : i32
    %13 = arith.extui %12 : i1 to i32
    %c0_i32_9 = arith.constant 0 : i32
    %14 = arith.cmpi ne, %13, %c0_i32_9 : i32
    scf.if %14 {
      %c0_10 = arith.constant 0 : index
      %c0_11 = arith.constant 0 : index
      %15 = vector.load %arg5[%c0_10, %c0_11] : memref<64x128xf32, #tpu.memory_space<vmem>>, vector<64x128xf32>
      %16 = arith.maximumf %15, %8 : vector<64x128xf32>
      %c0_12 = arith.constant 0 : index
      %c0_13 = arith.constant 0 : index
      %17 = vector.load %arg5[%c0_12, %c0_13] : memref<64x128xf32, #tpu.memory_space<vmem>>, vector<64x128xf32>
      tpu.vector_store %arg5[%c0_12, %c0_13], %16 {strides = array<i32>} : memref<64x128xf32, #tpu.memory_space<vmem>>, vector<64x128xf32>,
    } else {
    }
    return
  }
  func.func @transform_0(%arg0: i32, %arg1: i32) -> (i32, i32, i32) {
    %c0_i32 = arith.constant 0 : i32
    %c0_i32_0 = arith.constant 0 : i32
    return %arg1, %arg0, %c0_i32 : i32, i32, i32
  }
  func.func @transform_1(%arg0: i32, %arg1: i32) -> (i32, i32) {
    %c0_i32 = arith.constant 0 : i32
    %c0_i32_0 = arith.constant 0 : i32
    %c0_i32_1 = arith.constant 0 : i32
    return %c0_i32, %c0_i32_0 : i32, i32
  }
  func.func @transform_2(%arg0: i32, %arg1: i32) -> (i32, i32) {
    %c0_i32 = arith.constant 0 : i32
    %c0_i32_0 = arith.constant 0 : i32
    %c0_i32_1 = arith.constant 0 : i32
    return %c0_i32, %c0_i32_0 : i32, i32
  }
  func.func @transform_3(%arg0: i32, %arg1: i32) -> (i32, i32) {
    %c0_i32 = arith.constant 0 : i32
    %c0_i32_0 = arith.constant 0 : i32
    return %arg0, %c0_i32 : i32, i32
  }
}

module attributes {stable_mosaic.version = 11 : i64} {
  func.func @_matmul_bias_kernel(%arg0: i32, %arg1: memref<8x1568xbf16, #tpu.memory_space<vmem>>, %arg2: memref<1568x128xbf16, #tpu.memory_space<vmem>>, %arg3: memref<1x128xf32, #tpu.memory_space<vmem>>, %arg4: memref<8x128xf32, #tpu.memory_space<vmem>>) attributes {dimension_semantics = [#tpu.dimension_semantics<arbitrary>], iteration_bounds = array<i64: 1>, scalar_prefetch = 0 : i64, scratch_operands = 0 : i64, tpu.core_type = #tpu.core_type<tc>, window_params = [{pipeline_mode = #tpu.pipeline_mode<synchronous>, transform_indices = @transform_0, window_bounds = array<i64: 8, 1568>}, {pipeline_mode = #tpu.pipeline_mode<synchronous>, transform_indices = @transform_1, window_bounds = array<i64: 1568, 128>}, {pipeline_mode = #tpu.pipeline_mode<synchronous>, transform_indices = @transform_2, window_bounds = array<i64: 1, 128>}, {pipeline_mode = #tpu.pipeline_mode<synchronous>, transform_indices = @transform_3, window_bounds = array<i64: 8, 128>}]} {
    %c0 = arith.constant 0 : index
    %c0_0 = arith.constant 0 : index
    %0 = vector.load %arg1[%c0, %c0_0] : memref<8x1568xbf16, #tpu.memory_space<vmem>>, vector<8x1568xbf16>
    %c0_1 = arith.constant 0 : index
    %c0_2 = arith.constant 0 : index
    %1 = vector.load %arg2[%c0_1, %c0_2] : memref<1568x128xbf16, #tpu.memory_space<vmem>>, vector<1568x128xbf16>
    %cst = arith.constant dense<0.000000e+00> : vector<8x128xf32>
    %2 = tpu.matmul %0, %1, %cst {dimension_numbers = #tpu.dot_dimension_numbers<[1], [0], [0], [1], [0, 0, 1, 1], [], []>} : vector<8x1568xbf16>, vector<1568x128xbf16>, vector<8x128xf32> -> vector<8x128xf32>
    %c0_3 = arith.constant 0 : index
    %c0_4 = arith.constant 0 : index
    %3 = vector.load %arg3[%c0_3, %c0_4] : memref<1x128xf32, #tpu.memory_space<vmem>>, vector<1x128xf32>
    %4 = vector.broadcast %3 : vector<1x128xf32> to vector<8x128xf32>
    %5 = arith.addf %2, %4 : vector<8x128xf32>
    %c0_5 = arith.constant 0 : index
    %c0_6 = arith.constant 0 : index
    %6 = vector.load %arg4[%c0_5, %c0_6] : memref<8x128xf32, #tpu.memory_space<vmem>>, vector<8x128xf32>
    tpu.vector_store %arg4[%c0_5, %c0_6], %5 {strides = array<i32>} : memref<8x128xf32, #tpu.memory_space<vmem>>, vector<8x128xf32>,
    return
  }
  func.func @transform_0(%arg0: i32) -> (i32, i32) {
    %c0_i32 = arith.constant 0 : i32
    %c0_i32_0 = arith.constant 0 : i32
    %c0_i32_1 = arith.constant 0 : i32
    return %c0_i32, %c0_i32_0 : i32, i32
  }
  func.func @transform_1(%arg0: i32) -> (i32, i32) {
    %c0_i32 = arith.constant 0 : i32
    %c0_i32_0 = arith.constant 0 : i32
    %c0_i32_1 = arith.constant 0 : i32
    return %c0_i32, %c0_i32_0 : i32, i32
  }
  func.func @transform_2(%arg0: i32) -> (i32, i32) {
    %c0_i32 = arith.constant 0 : i32
    %c0_i32_0 = arith.constant 0 : i32
    %c0_i32_1 = arith.constant 0 : i32
    return %c0_i32, %c0_i32_0 : i32, i32
  }
  func.func @transform_3(%arg0: i32) -> (i32, i32) {
    %c0_i32 = arith.constant 0 : i32
    %c0_i32_0 = arith.constant 0 : i32
    %c0_i32_1 = arith.constant 0 : i32
    return %c0_i32, %c0_i32_0 : i32, i32
  }
}

</mosaic_0001>

<llo_original>
// kernel: cnn_forward.3
$region0: #{cnn_forward.3}
  #allocation0 [shape = 'u32[]', space=smem, size = 0x4, offset = 0x4, fixed_abs, tag = 'smem constant byte address 0x4 - core index']
  #allocation1 [shape = 'u32[144,128]{1,0:T(1,128)}', space=vmem, size = 0x12000, scoped, tag = 'internal scratch']
  %s0 = inlined_call_operand.vmem [shape: bf16[4,512,128], index: 0, kind: input, shape index: {}]
  %s1 = inlined_call_operand.vmem [shape: bf16[128,128], index: 1, kind: input, shape index: {}]
  %s2 = inlined_call_operand.vmem [shape: f32[1,128], index: 2, kind: input, shape index: {}]
  %s3 = inlined_call_operand.vmem [shape: f32[512,128], index: 3, kind: output, shape index: {}]
  %s4 = sld [smem:[#allocation0]]
  $region53: #{cnn_forward.3} parent=0
    _
  %s6 = ssub.s32 1, %s4
  %s7 = scalar_select 0, %s6, %s4
  loop: start=0, step=1, limit=10
  $region2: #{cnn_forward.3} parent=0 // loop_pre_header
    _
  $region3: #{cnn_forward.3} parent=0 // loop_header
    %s9 = sphi 0, %s13
    %p10 = scmp.ge.s32.totalorder %s9, 10
    %s16 = sphi 0, %s28
    %s17 = sphi 0, %s24
    %s18 = sphi 0, %s16
    %s19 = sphi 0, %s17
    %s20 = sphi 0, %s18
    %s21 = sphi 0, %s19
    %s33 = sphi 0, %s35
    %s36 = sphi 0, %s33
    %s37 = sphi 0, %s36
    %s53 = sphi 0, %s37
    %s57 = sphi 0, %s57
    %s59 = sphi 0, %s57
    %s60 = sphi 0, %s59
    %s74 = sphi 0, %s60
    %s78 = sphi 0, %s78
    %s80 = sphi 0, %s78
    %s81 = sphi 0, %s80
    %s95 = sphi 0, %s81
    %s101 = sphi 0, %s103
    %s104 = sphi 0, %s101
    %s105 = sphi 0, %s104
    %s121 = sphi 0, %s105
  $region4: #{cnn_forward.3} parent=0 // loop_header_branch
    %12 = sbr.rel (%p10) target = $region8
  $region5: #{cnn_forward.3} parent=0 // loop_body
    %s14 = ssub.s32 %s9, 1
    %s15 = ssub.s32 %s9, 2
    %s22 = sadd.s32 1, %s17
    %p23 = scmp.ge.s32.totalorder %s22, 4
    %s24 = scalar_select %p23, 0, %s22
    %s25 = sadd.s32 1, %s16
    %s26 = scalar_select %p23, %s25, %s16
    %p27 = scmp.ge.s32.totalorder %s26, 2
    %s28 = scalar_select %p27, 0, %s26
    %s29 = ssub.s32 %s17, %s24
    %s30 = ssub.s32 %s16, %s28
    %s31 = sor.u32 %s29, %s30
    %p32 = scmp.eq.s32.totalorder %s31, 0
    %s34 = sadd.s32 %s33, 1
    %s35 = scalar_select %p32, %s33, %s34
    %p38 = pneg %p32
    %p39 = scmp.eq.s32.totalorder %s9, 7
    %p40 = por %p38, %p39
    %p41 = scmp.ne.s32.totalorder %s33, %s36
    %p42 = scmp.eq.s32.totalorder %s9, 0
    %p43 = por %p41, %p42
    %p44 = scmp.ne.s32.totalorder %s33, %s36
    %p45 = scmp.eq.s32.totalorder %s14, 7
    %p46 = por %p44, %p45
    %p47 = scmp.ne.s32.totalorder %s36, %s37
    %p48 = scmp.eq.s32.totalorder %s14, 0
    %p49 = por %p47, %p48
    %p50 = scmp.ne.s32.totalorder %s36, %s37
    %p51 = scmp.eq.s32.totalorder %s15, 7
    %p52 = por %p50, %p51
    %p54 = scmp.ne.s32.totalorder %s37, %s53
    %p55 = scmp.eq.s32.totalorder %s15, 0
    %p56 = por %p54, %p55
    %s58 = sadd.s32 %s57, 1
    %p61 = scmp.eq.s32.totalorder %s9, 7
    %p62 = scmp.ne.s32.totalorder %s57, %s59
    %p63 = scmp.eq.s32.totalorder %s9, 0
    %p64 = por %p62, %p63
    %p65 = scmp.ne.s32.totalorder %s57, %s59
    %p66 = scmp.eq.s32.totalorder %s14, 7
    %p67 = por %p65, %p66
    %p68 = scmp.ne.s32.totalorder %s59, %s60
    %p69 = scmp.eq.s32.totalorder %s14, 0
    %p70 = por %p68, %p69
    %p71 = scmp.ne.s32.totalorder %s59, %s60
    %p72 = scmp.eq.s32.totalorder %s15, 7
    %p73 = por %p71, %p72
    %p75 = scmp.ne.s32.totalorder %s60, %s74
    %p76 = scmp.eq.s32.totalorder %s15, 0
    %p77 = por %p75, %p76
    %s79 = sadd.s32 %s78, 1
    %p82 = scmp.eq.s32.totalorder %s9, 7
    %p83 = scmp.ne.s32.totalorder %s78, %s80
    %p84 = scmp.eq.s32.totalorder %s9, 0
    %p85 = por %p83, %p84
    %p86 = scmp.ne.s32.totalorder %s78, %s80
    %p87 = scmp.eq.s32.totalorder %s14, 7
    %p88 = por %p86, %p87
    %p89 = scmp.ne.s32.totalorder %s80, %s81
    %p90 = scmp.eq.s32.totalorder %s14, 0
    %p91 = por %p89, %p90
    %p92 = scmp.ne.s32.totalorder %s80, %s81
    %p93 = scmp.eq.s32.totalorder %s15, 7
    %p94 = por %p92, %p93
    %p96 = scmp.ne.s32.totalorder %s81, %s95
    %p97 = scmp.eq.s32.totalorder %s15, 0
    %p98 = por %p96, %p97
    %s99 = ssub.s32 %s16, %s28
    %p100 = scmp.eq.s32.totalorder %s99, 0
    %s102 = sadd.s32 %s101, 1
    %s103 = scalar_select %p100, %s101, %s102
    %p106 = pneg %p100
    %p107 = scmp.eq.s32.totalorder %s9, 7
    %p108 = por %p106, %p107
    %p109 = scmp.ne.s32.totalorder %s101, %s104
    %p110 = scmp.eq.s32.totalorder %s9, 0
    %p111 = por %p109, %p110
    %p112 = scmp.ne.s32.totalorder %s101, %s104
    %p113 = scmp.eq.s32.totalorder %s14, 7
    %p114 = por %p112, %p113
    %p115 = scmp.ne.s32.totalorder %s104, %s105
    %p116 = scmp.eq.s32.totalorder %s14, 0
    %p117 = por %p115, %p116
    %p118 = scmp.ne.s32.totalorder %s104, %s105
    %p119 = scmp.eq.s32.totalorder %s15, 7
    %p120 = por %p118, %p119
    %p122 = scmp.ne.s32.totalorder %s105, %s121
    %p123 = scmp.eq.s32.totalorder %s15, 0
    %p124 = por %p122, %p123
    %p125 = scmp.le.s32.totalorder 1, %s9
    %p126 = scmp.lt.s32.totalorder %s9, 9
    %p127 = pnand %p125, %p126
    %p128 = pneg %p127
    // Predicated region
    $region9: #{cnn_forward.3} parent=5 // pred_check
      _
    $region10: #{cnn_forward.3} parent=5 // pred_check_branch
      %130 = sbr.rel (%p127) target = $region12
    $region11: #{cnn_forward.3} parent=5 // pred_region
      %s131 = ssub.s32 %s9, 1
      // Predicated region
      $region13: #{cnn_forward.3} parent=11 // pred_check
        %p132 = pneg %p70
      $region14: #{cnn_forward.3} parent=11 // pred_check_branch
        %134 = sbr.rel (%p132) target = $region16
      $region15: #{cnn_forward.3} parent=11 // pred_region
        _
      $region16: #{cnn_forward.3} parent=11 // pred_fallthru
        _
      // Predicated region
      $region17: #{cnn_forward.3} parent=11 // pred_check
        %p135 = pneg %p91
      $region18: #{cnn_forward.3} parent=11 // pred_check_branch
        %137 = sbr.rel (%p135) target = $region20
      $region19: #{cnn_forward.3} parent=11 // pred_region
        _
      $region20: #{cnn_forward.3} parent=11 // pred_fallthru
        _
    $region12: #{cnn_forward.3} parent=5 // pred_fallthru
      _
    %p138 = scmp.lt.s32.totalorder %s9, 8
    // Predicated region
    $region21: #{cnn_forward.3} parent=5 // pred_check
      %p139 = pneg %p138
    $region22: #{cnn_forward.3} parent=5 // pred_check_branch
      %141 = sbr.rel (%p139) target = $region24
    $region23: #{cnn_forward.3} parent=5 // pred_region
      // Predicated region
      $region25: #{cnn_forward.3} parent=23 // pred_check
        %p142 = pneg %p43
      $region26: #{cnn_forward.3} parent=23 // pred_check_branch
        %144 = sbr.rel (%p142) target = $region28
      $region27: #{cnn_forward.3} parent=23 // pred_region
        %s145 = smul.u32 32, %s16
        %p146 = scmp.lt.s32.totalorder %s17, 3
        %s147 = scalar_select %p146, %s17, 3
        %p148 = scmp.lt.s32.totalorder %s145, 63
        %s149 = scalar_select %p148, %s145, 63
        %s150 = smul.addr %s147, 64
        %s151 = sadd.s32 %s149, %s150
        %s152 = smul.addr %s151, 4
        %s153 = scalar_lea.vmem %s0, %s152
        %s154 = smul.u32 32, %s16
      $region28: #{cnn_forward.3} parent=23 // pred_fallthru
        _
    $region24: #{cnn_forward.3} parent=5 // pred_fallthru
      _
    %p155 = scmp.le.s32.totalorder 1, %s9
    %p156 = scmp.lt.s32.totalorder %s9, 9
    %p157 = pnand %p155, %p156
    %p158 = pneg %p157
    // Predicated region
    $region29: #{cnn_forward.3} parent=5 // pred_check
      _
    $region30: #{cnn_forward.3} parent=5 // pred_check_branch
      %160 = sbr.rel (%p157) target = $region32
    $region31: #{cnn_forward.3} parent=5 // pred_region
      %s161 = ssub.s32 %s9, 1
      %s162 = smul.u32 32, %s18
      %p163 = scmp.lt.s32.totalorder %s19, 3
      %s164 = scalar_select %p163, %s19, 3
      %p165 = scmp.lt.s32.totalorder %s162, 63
      %s166 = scalar_select %p165, %s162, 63
      %s167 = smul.addr %s164, 64
      %s168 = sadd.s32 %s166, %s167
      %s169 = smul.addr %s168, 4
      %s170 = scalar_lea.vmem %s0, %s169
      %p171 = pneg %p49
      %p172 = pneg %p46
      %p173 = pneg %p70
      %p174 = pneg %p67
      %p175 = pneg %p91
      %p176 = pneg %p88
      %p177 = pneg %p117
      %p178 = pneg %p114
      %s179 = smul.u32 32, %s18
      %p180 = scmp.lt.s32.totalorder %s179, 63
      %s181 = scalar_select %p180, %s179, 63
      %s182 = smul.addr %s181, 8
      %s183 = scalar_lea.vmem %s3, %s182
      %s184 = smul.u32 32, %s18
      %p185 = scmp.lt.s32.totalorder %s19, 3
      %s186 = scalar_select %p185, %s19, 3
      %p187 = scmp.lt.s32.totalorder %s184, 63
      %s188 = scalar_select %p187, %s184, 63
      %s189 = smul.addr %s186, 64
      %s190 = sadd.s32 %s188, %s189
      %s191 = smul.addr %s190, 4
      %s192 = scalar_lea.vmem %s0, %s191
      %s193 = smul.u32 32, %s18
      %s194 = smul.u32 32, %s18
      %p195 = scmp.lt.s32.totalorder %s194, 63
      %s196 = scalar_select %p195, %s194, 63
      %s197 = smul.addr %s196, 8
      %s198 = scalar_lea.vmem %s3, %s197
      %s199 = smul.u32 32, %s18
      %v201 = vld [vmem:[%s192] sm:$0xf]
      %v202 = vld [vmem:[%s192 + $0x4] sm:$0xf]
      %v203 = vld [vmem:[%s192 + $0x8] sm:$0xf]
      %v204 = vld [vmem:[%s192 + $0xc] sm:$0xf]
      %v205 = vld [vmem:[%s192 + $0x10] sm:$0xf]
      %v206 = vld [vmem:[%s192 + $0x14] sm:$0xf]
      %v207 = vld [vmem:[%s192 + $0x18] sm:$0xf]
      %v208 = vld [vmem:[%s192 + $0x1c] sm:$0xf]
      %v209 = vld [vmem:[%s192 + $0x20] sm:$0xf]
      %v210 = vld [vmem:[%s192 + $0x24] sm:$0xf]
      %v211 = vld [vmem:[%s192 + $0x28] sm:$0xf]
      %v212 = vld [vmem:[%s192 + $0x2c] sm:$0xf]
      %v213 = vld [vmem:[%s192 + $0x30] sm:$0xf]
      %v214 = vld [vmem:[%s192 + $0x34] sm:$0xf]
      %v215 = vld [vmem:[%s192 + $0x38] sm:$0xf]
      %v216 = vld [vmem:[%s192 + $0x3c] sm:$0xf]
      %v217 = vld [vmem:[%s192 + $0x40] sm:$0xf]
      %v218 = vld [vmem:[%s192 + $0x44] sm:$0xf]
      %v219 = vld [vmem:[%s192 + $0x48] sm:$0xf]
      %v220 = vld [vmem:[%s192 + $0x4c] sm:$0xf]
      %v221 = vld [vmem:[%s192 + $0x50] sm:$0xf]
      %v222 = vld [vmem:[%s192 + $0x54] sm:$0xf]
      %v223 = vld [vmem:[%s192 + $0x58] sm:$0xf]
      %v224 = vld [vmem:[%s192 + $0x5c] sm:$0xf]
      %v225 = vld [vmem:[%s192 + $0x60] sm:$0xf]
      %v226 = vld [vmem:[%s192 + $0x64] sm:$0xf]
      %v227 = vld [vmem:[%s192 + $0x68] sm:$0xf]
      %v228 = vld [vmem:[%s192 + $0x6c] sm:$0xf]
      %v229 = vld [vmem:[%s192 + $0x70] sm:$0xf]
      %v230 = vld [vmem:[%s192 + $0x74] sm:$0xf]
      %v231 = vld [vmem:[%s192 + $0x78] sm:$0xf]
      %v232 = vld [vmem:[%s192 + $0x7c] sm:$0xf]
      %v233 = vld [vmem:[%s1] sm:$0xf]
      %v234 = vld [vmem:[%s1 + $0x4] sm:$0xf]
      %v235 = vld [vmem:[%s1 + $0x8] sm:$0xf]
      %v236 = vld [vmem:[%s1 + $0xc] sm:$0xf]
      %v237 = vld [vmem:[%s1 + $0x10] sm:$0xf]
      %v238 = vld [vmem:[%s1 + $0x14] sm:$0xf]
      %v239 = vld [vmem:[%s1 + $0x18] sm:$0xf]
      %v240 = vld [vmem:[%s1 + $0x1c] sm:$0xf]
      %v241 = vld [vmem:[%s1 + $0x20] sm:$0xf]
      %v242 = vld [vmem:[%s1 + $0x24] sm:$0xf]
      %v243 = vld [vmem:[%s1 + $0x28] sm:$0xf]
      %v244 = vld [vmem:[%s1 + $0x2c] sm:$0xf]
      %v245 = vld [vmem:[%s1 + $0x30] sm:$0xf]
      %v246 = vld [vmem:[%s1 + $0x34] sm:$0xf]
      %v247 = vld [vmem:[%s1 + $0x38] sm:$0xf]
      %v248 = vld [vmem:[%s1 + $0x3c] sm:$0xf]
      %v249 = vld [vmem:[%s2] sm:$0x1]
      %v251 = vlaneseq
      %v252 = vshrl.u32 %v251, 7
      %v253 = vsub.s32 0, %v252
      %v254 = vrot.slane %v249, %v253
      %v288 = vunpack.c.l.b16 %v201
      %v289 = vunpack.c.l.b16 %v202
      %v290 = vunpack.c.l.b16 %v203
      %v291 = vunpack.c.l.b16 %v204
      %v292 = vunpack.c.l.b16 %v205
      %v293 = vunpack.c.l.b16 %v206
      %v294 = vunpack.c.l.b16 %v207
      %v295 = vunpack.c.l.b16 %v208
      %v296 = vunpack.c.l.b16 %v209
      %v297 = vunpack.c.l.b16 %v210
      %v298 = vunpack.c.l.b16 %v211
      %v299 = vunpack.c.l.b16 %v212
      %v300 = vunpack.c.l.b16 %v213
      %v301 = vunpack.c.l.b16 %v214
      %v302 = vunpack.c.l.b16 %v215
      %v303 = vunpack.c.l.b16 %v216
      %v304 = vunpack.c.l.b16 %v217
      %v305 = vunpack.c.l.b16 %v218
      %v306 = vunpack.c.l.b16 %v219
      %v307 = vunpack.c.l.b16 %v220
      %v308 = vunpack.c.l.b16 %v221
      %v309 = vunpack.c.l.b16 %v222
      %v310 = vunpack.c.l.b16 %v223
      %v311 = vunpack.c.l.b16 %v224
      %v312 = vunpack.c.l.b16 %v225
      %v313 = vunpack.c.l.b16 %v226
      %v314 = vunpack.c.l.b16 %v227
      %v315 = vunpack.c.l.b16 %v228
      %v316 = vunpack.c.l.b16 %v229
      %v317 = vunpack.c.l.b16 %v230
      %v318 = vunpack.c.l.b16 %v231
      %v319 = vunpack.c.l.b16 %v232
      %v320 = vpack.c.b16 %v289, %v288
      %v321 = vpack.c.b16 %v291, %v290
      %v322 = vpack.c.b16 %v293, %v292
      %v323 = vpack.c.b16 %v295, %v294
      %v324 = vpack.c.b16 %v297, %v296
      %v325 = vpack.c.b16 %v299, %v298
      %v326 = vpack.c.b16 %v301, %v300
      %v327 = vpack.c.b16 %v303, %v302
      %v328 = vpack.c.b16 %v305, %v304
      %v329 = vpack.c.b16 %v307, %v306
      %v330 = vpack.c.b16 %v309, %v308
      %v331 = vpack.c.b16 %v311, %v310
      %v332 = vpack.c.b16 %v313, %v312
      %v333 = vpack.c.b16 %v315, %v314
      %v334 = vpack.c.b16 %v317, %v316
      %v335 = vpack.c.b16 %v319, %v318
      %v368 = vunpack.c.l.b16 %v233
      %v369 = vunpack.c.l.b16 %v234
      %v370 = vunpack.c.l.b16 %v235
      %v371 = vunpack.c.l.b16 %v236
      %v372 = vunpack.c.l.b16 %v237
      %v373 = vunpack.c.l.b16 %v238
      %v374 = vunpack.c.l.b16 %v239
      %v375 = vunpack.c.l.b16 %v240
      %v376 = vunpack.c.l.b16 %v241
      %v377 = vunpack.c.l.b16 %v242
      %v378 = vunpack.c.l.b16 %v243
      %v379 = vunpack.c.l.b16 %v244
      %v380 = vunpack.c.l.b16 %v245
      %v381 = vunpack.c.l.b16 %v246
      %v382 = vunpack.c.l.b16 %v247
      %v383 = vunpack.c.l.b16 %v248
      %v384 = vpack.c.b16 %v369, %v368
      %v385 = vpack.c.b16 %v371, %v370
      %v386 = vpack.c.b16 %v373, %v372
      %v387 = vpack.c.b16 %v375, %v374
      %v388 = vpack.c.b16 %v377, %v376
      %v389 = vpack.c.b16 %v379, %v378
      %v390 = vpack.c.b16 %v381, %v380
      %v391 = vpack.c.b16 %v383, %v382
      %400 = vmatprep.subr.bf16.mxu0 0
      %401 = vmatpush1.bf16.msra.mxu0 %v384
      %402 = vmatprep.subr.bf16.mxu0 0
      %403 = vmatpush1.bf16.msra.mxu0 %v385
      %404 = vmatprep.subr.bf16.mxu0 0
      %405 = vmatpush1.bf16.msra.mxu0 %v386
      %406 = vmatprep.subr.bf16.mxu0 0
      %407 = vmatpush1.bf16.msra.mxu0 %v387
      %408 = vmatprep.subr.bf16.mxu0 0
      %409 = vmatpush1.bf16.msra.mxu0 %v388
      %410 = vmatprep.subr.bf16.mxu0 0
      %411 = vmatpush1.bf16.msra.mxu0 %v389
      %412 = vmatprep.subr.bf16.mxu0 0
      %413 = vmatpush1.bf16.msra.mxu0 %v390
      %414 = vmatprep.subr.bf16.mxu0 0
      %415 = vmatpush1.bf16.msra.mxu0 %v391
      %416 = vmatprep.subr.bf16.mxu0 0
      %417 = vmatpush1.bf16.msra.mxu0 0
      %418 = vmatprep.subr.bf16.mxu0 0
      %419 = vmatpush1.bf16.msra.mxu0 0
      %420 = vmatprep.subr.bf16.mxu0 0
      %421 = vmatpush1.bf16.msra.mxu0 0
      %422 = vmatprep.subr.bf16.mxu0 0
      %423 = vmatpush1.bf16.msra.mxu0 0
      %424 = vmatprep.subr.bf16.mxu0 0
      %425 = vmatpush1.bf16.msra.mxu0 0
      %426 = vmatprep.subr.bf16.mxu0 0
      %427 = vmatpush1.bf16.msra.mxu0 0
      %428 = vmatprep.subr.bf16.mxu0 0
      %429 = vmatpush1.bf16.msra.mxu0 0
      %430 = vmatprep.subr.bf16.mxu0 0
      %431 = vmatpush1.bf16.msra.mxu0 0
      %432 = vmatprep.mubr.bf16.mxu0 0
      %433 = vmatmul.mubr.bf16.gmra.mrb[0].mxu0 %v320
      %v434 = vpop.f32.mrb[0].mxu0
      %v435 = vadd.f32 %v254, %v434
      %v436 = vpop.f32.mrb[0].mxu0
      %v437 = vpop.f32.mrb[0].mxu0
      %v438 = vadd.f32 %v254, %v437
      %v439 = vpop.f32.mrb[0].mxu0
      %440 = vmatprep.mubr.bf16.mxu0 0
      %441 = vmatmul.mubr.bf16.gmra.mrb[0].mxu0 %v321
      %v442 = vpop.f32.mrb[0].mxu0
      %v443 = vadd.f32 %v254, %v442
      %v444 = vpop.f32.mrb[0].mxu0
      %v445 = vpop.f32.mrb[0].mxu0
      %v446 = vadd.f32 %v254, %v445
      %v447 = vpop.f32.mrb[0].mxu0
      %448 = vmatprep.mubr.bf16.mxu0 0
      %449 = vmatmul.mubr.bf16.gmra.mrb[0].mxu0 %v322
      %v450 = vpop.f32.mrb[0].mxu0
      %v451 = vadd.f32 %v254, %v450
      %v452 = vpop.f32.mrb[0].mxu0
      %v453 = vpop.f32.mrb[0].mxu0
      %v454 = vadd.f32 %v254, %v453
      %v455 = vpop.f32.mrb[0].mxu0
      %456 = vmatprep.mubr.bf16.mxu0 0
      %457 = vmatmul.mubr.bf16.gmra.mrb[0].mxu0 %v323
      %v458 = vpop.f32.mrb[0].mxu0
      %v459 = vadd.f32 %v254, %v458
      %v460 = vpop.f32.mrb[0].mxu0
      %v461 = vpop.f32.mrb[0].mxu0
      %v462 = vadd.f32 %v254, %v461
      %v463 = vpop.f32.mrb[0].mxu0
      %464 = vmatprep.mubr.bf16.mxu0 0
      %465 = vmatmul.mubr.bf16.gmra.mrb[0].mxu0 %v324
      %v466 = vpop.f32.mrb[0].mxu0
      %v467 = vadd.f32 %v254, %v466
      %v468 = vpop.f32.mrb[0].mxu0
      %v469 = vpop.f32.mrb[0].mxu0
      %v470 = vadd.f32 %v254, %v469
      %v471 = vpop.f32.mrb[0].mxu0
      %472 = vmatprep.mubr.bf16.mxu0 0
      %473 = vmatmul.mubr.bf16.gmra.mrb[0].mxu0 %v325
      %v474 = vpop.f32.mrb[0].mxu0
      %v475 = vadd.f32 %v254, %v474
      %v476 = vpop.f32.mrb[0].mxu0
      %v477 = vpop.f32.mrb[0].mxu0
      %v478 = vadd.f32 %v254, %v477
      %v479 = vpop.f32.mrb[0].mxu0
      %480 = vmatprep.mubr.bf16.mxu0 0
      %481 = vmatmul.mubr.bf16.gmra.mrb[0].mxu0 %v326
      %v482 = vpop.f32.mrb[0].mxu0
      %v483 = vadd.f32 %v254, %v482
      %v484 = vpop.f32.mrb[0].mxu0
      %v485 = vpop.f32.mrb[0].mxu0
      %v486 = vadd.f32 %v254, %v485
      %v487 = vpop.f32.mrb[0].mxu0
      %488 = vmatprep.mubr.bf16.mxu0 0
      %489 = vmatmul.mubr.bf16.gmra.mrb[0].mxu0 %v327
      %v490 = vpop.f32.mrb[0].mxu0
      %v491 = vadd.f32 %v254, %v490
      %v492 = vpop.f32.mrb[0].mxu0
      %v493 = vpop.f32.mrb[0].mxu0
      %v494 = vadd.f32 %v254, %v493
      %v495 = vpop.f32.mrb[0].mxu0
      %496 = vmatprep.mubr.bf16.mxu0 0
      %497 = vmatmul.mubr.bf16.gmra.mrb[0].mxu0 %v328
      %v498 = vpop.f32.mrb[0].mxu0
      %v499 = vadd.f32 %v254, %v498
      %v500 = vpop.f32.mrb[0].mxu0
      %v501 = vpop.f32.mrb[0].mxu0
      %v502 = vadd.f32 %v254, %v501
      %v503 = vpop.f32.mrb[0].mxu0
      %504 = vmatprep.mubr.bf16.mxu0 0
      %505 = vmatmul.mubr.bf16.gmra.mrb[0].mxu0 %v329
      %v506 = vpop.f32.mrb[0].mxu0
      %v507 = vadd.f32 %v254, %v506
      %v508 = vpop.f32.mrb[0].mxu0
      %v509 = vpop.f32.mrb[0].mxu0
      %v510 = vadd.f32 %v254, %v509
      %v511 = vpop.f32.mrb[0].mxu0
      %512 = vmatprep.mubr.bf16.mxu0 0
      %513 = vmatmul.mubr.bf16.gmra.mrb[0].mxu0 %v330
      %v514 = vpop.f32.mrb[0].mxu0
      %v515 = vadd.f32 %v254, %v514
      %v516 = vpop.f32.mrb[0].mxu0
      %v517 = vpop.f32.mrb[0].mxu0
      %v518 = vadd.f32 %v254, %v517
      %v519 = vpop.f32.mrb[0].mxu0
      %520 = vmatprep.mubr.bf16.mxu0 0
      %521 = vmatmul.mubr.bf16.gmra.mrb[0].mxu0 %v331
      %v522 = vpop.f32.mrb[0].mxu0
      %v523 = vadd.f32 %v254, %v522
      %v524 = vpop.f32.mrb[0].mxu0
      %v525 = vpop.f32.mrb[0].mxu0
      %v526 = vadd.f32 %v254, %v525
      %v527 = vpop.f32.mrb[0].mxu0
      %528 = vmatprep.mubr.bf16.mxu0 0
      %529 = vmatmul.mubr.bf16.gmra.mrb[0].mxu0 %v332
      %v530 = vpop.f32.mrb[0].mxu0
      %v531 = vadd.f32 %v254, %v530
      %v532 = vpop.f32.mrb[0].mxu0
      %v533 = vpop.f32.mrb[0].mxu0
      %v534 = vadd.f32 %v254, %v533
      %v535 = vpop.f32.mrb[0].mxu0
      %536 = vmatprep.mubr.bf16.mxu0 0
      %537 = vmatmul.mubr.bf16.gmra.mrb[0].mxu0 %v333
      %v538 = vpop.f32.mrb[0].mxu0
      %v539 = vadd.f32 %v254, %v538
      %v540 = vpop.f32.mrb[0].mxu0
      %v541 = vpop.f32.mrb[0].mxu0
      %v542 = vadd.f32 %v254, %v541
      %v543 = vpop.f32.mrb[0].mxu0
      %544 = vmatprep.mubr.bf16.mxu0 0
      %545 = vmatmul.mubr.bf16.gmra.mrb[0].mxu0 %v334
      %v546 = vpop.f32.mrb[0].mxu0
      %v547 = vadd.f32 %v254, %v546
      %v548 = vpop.f32.mrb[0].mxu0
      %v549 = vpop.f32.mrb[0].mxu0
      %v550 = vadd.f32 %v254, %v549
      %v551 = vpop.f32.mrb[0].mxu0
      %552 = vmatprep.mubr.bf16.mxu0 0
      %553 = vmatmul.mubr.bf16.gmra.mrb[0].mxu0 %v335
      %v554 = vpop.f32.mrb[0].mxu0
      %v555 = vadd.f32 %v254, %v554
      %v556 = vpop.f32.mrb[0].mxu0
      %v557 = vpop.f32.mrb[0].mxu0
      %v558 = vadd.f32 %v254, %v557
      %v559 = vpop.f32.mrb[0].mxu0
      %560 = vdwg.mxu0
      %v561 = vmax.f32 %v435, 0.0
      %v562 = vmax.f32 %v438, 0.0
      %v563 = vmax.f32 %v443, 0.0
      %v564 = vmax.f32 %v446, 0.0
      %v565 = vmax.f32 %v451, 0.0
      %v566 = vmax.f32 %v454, 0.0
      %v567 = vmax.f32 %v459, 0.0
      %v568 = vmax.f32 %v462, 0.0
      %v569 = vmax.f32 %v467, 0.0
      %v570 = vmax.f32 %v470, 0.0
      %v571 = vmax.f32 %v475, 0.0
      %v572 = vmax.f32 %v478, 0.0
      %v573 = vmax.f32 %v483, 0.0
      %v574 = vmax.f32 %v486, 0.0
      %v575 = vmax.f32 %v491, 0.0
      %v576 = vmax.f32 %v494, 0.0
      %v577 = vmax.f32 %v499, 0.0
      %v578 = vmax.f32 %v502, 0.0
      %v579 = vmax.f32 %v507, 0.0
      %v580 = vmax.f32 %v510, 0.0
      %v581 = vmax.f32 %v515, 0.0
      %v582 = vmax.f32 %v518, 0.0
      %v583 = vmax.f32 %v523, 0.0
      %v584 = vmax.f32 %v526, 0.0
      %v585 = vmax.f32 %v531, 0.0
      %v586 = vmax.f32 %v534, 0.0
      %v587 = vmax.f32 %v539, 0.0
      %v588 = vmax.f32 %v542, 0.0
      %v589 = vmax.f32 %v547, 0.0
      %v590 = vmax.f32 %v550, 0.0
      %v591 = vmax.f32 %v555, 0.0
      %v592 = vmax.f32 %v558, 0.0
      %p593 = scmp.eq.s32.totalorder %s19, 0
      // Predicated region
      $region33: #{cnn_forward.3} parent=31 // pred_check
        %p594 = pneg %p593
      $region34: #{cnn_forward.3} parent=31 // pred_check_branch
        %596 = sbr.rel (%p594) target = $region36
      $region35: #{cnn_forward.3} parent=31 // pred_region
        %597 = vst [vmem:[%s198] sm:$0xff] %v561
        %598 = vst [vmem:[%s198 + $0x8] sm:$0xff] %v562
        %599 = vst [vmem:[%s198 + $0x10] sm:$0xff] %v563
        %600 = vst [vmem:[%s198 + $0x18] sm:$0xff] %v564
        %601 = vst [vmem:[%s198 + $0x20] sm:$0xff] %v565
        %602 = vst [vmem:[%s198 + $0x28] sm:$0xff] %v566
        %603 = vst [vmem:[%s198 + $0x30] sm:$0xff] %v567
        %604 = vst [vmem:[%s198 + $0x38] sm:$0xff] %v568
        %605 = vst [vmem:[%s198 + $0x40] sm:$0xff] %v569
        %606 = vst [vmem:[%s198 + $0x48] sm:$0xff] %v570
        %607 = vst [vmem:[%s198 + $0x50] sm:$0xff] %v571
        %608 = vst [vmem:[%s198 + $0x58] sm:$0xff] %v572
        %609 = vst [vmem:[%s198 + $0x60] sm:$0xff] %v573
        %610 = vst [vmem:[%s198 + $0x68] sm:$0xff] %v574
        %611 = vst [vmem:[%s198 + $0x70] sm:$0xff] %v575
        %612 = vst [vmem:[%s198 + $0x78] sm:$0xff] %v576
        %613 = vst [vmem:[%s198 + $0x80] sm:$0xff] %v577
        %614 = vst [vmem:[%s198 + $0x88] sm:$0xff] %v578
        %615 = vst [vmem:[%s198 + $0x90] sm:$0xff] %v579
        %616 = vst [vmem:[%s198 + $0x98] sm:$0xff] %v580
        %617 = vst [vmem:[%s198 + $0xa0] sm:$0xff] %v581
        %618 = vst [vmem:[%s198 + $0xa8] sm:$0xff] %v582
        %619 = vst [vmem:[%s198 + $0xb0] sm:$0xff] %v583
        %620 = vst [vmem:[%s198 + $0xb8] sm:$0xff] %v584
        %621 = vst [vmem:[%s198 + $0xc0] sm:$0xff] %v585
        %622 = vst [vmem:[%s198 + $0xc8] sm:$0xff] %v586
        %623 = vst [vmem:[%s198 + $0xd0] sm:$0xff] %v587
        %624 = vst [vmem:[%s198 + $0xd8] sm:$0xff] %v588
        %625 = vst [vmem:[%s198 + $0xe0] sm:$0xff] %v589
        %626 = vst [vmem:[%s198 + $0xe8] sm:$0xff] %v590
        %627 = vst [vmem:[%s198 + $0xf0] sm:$0xff] %v591
        %628 = vst [vmem:[%s198 + $0xf8] sm:$0xff] %v592
      $region36: #{cnn_forward.3} parent=31 // pred_fallthru
        _
      %p629 = scmp.gt.s32.totalorder %s19, 0
      // Predicated region
      $region37: #{cnn_forward.3} parent=31 // pred_check
        %p630 = pneg %p629
      $region38: #{cnn_forward.3} parent=31 // pred_check_branch
        %632 = sbr.rel (%p630) target = $region40
      $region39: #{cnn_forward.3} parent=31 // pred_region
        %v633 = vld [vmem:[%s198] sm:$0xff]
        %v634 = vld [vmem:[%s198 + $0x8] sm:$0xff]
        %v635 = vld [vmem:[%s198 + $0x10] sm:$0xff]
        %v636 = vld [vmem:[%s198 + $0x18] sm:$0xff]
        %v637 = vld [vmem:[%s198 + $0x20] sm:$0xff]
        %v638 = vld [vmem:[%s198 + $0x28] sm:$0xff]
        %v639 = vld [vmem:[%s198 + $0x30] sm:$0xff]
        %v640 = vld [vmem:[%s198 + $0x38] sm:$0xff]
        %v641 = vld [vmem:[%s198 + $0x40] sm:$0xff]
        %v642 = vld [vmem:[%s198 + $0x48] sm:$0xff]
        %v643 = vld [vmem:[%s198 + $0x50] sm:$0xff]
        %v644 = vld [vmem:[%s198 + $0x58] sm:$0xff]
        %v645 = vld [vmem:[%s198 + $0x60] sm:$0xff]
        %v646 = vld [vmem:[%s198 + $0x68] sm:$0xff]
        %v647 = vld [vmem:[%s198 + $0x70] sm:$0xff]
        %v648 = vld [vmem:[%s198 + $0x78] sm:$0xff]
        %v649 = vld [vmem:[%s198 + $0x80] sm:$0xff]
        %v650 = vld [vmem:[%s198 + $0x88] sm:$0xff]
        %v651 = vld [vmem:[%s198 + $0x90] sm:$0xff]
        %v652 = vld [vmem:[%s198 + $0x98] sm:$0xff]
        %v653 = vld [vmem:[%s198 + $0xa0] sm:$0xff]
        %v654 = vld [vmem:[%s198 + $0xa8] sm:$0xff]
        %v655 = vld [vmem:[%s198 + $0xb0] sm:$0xff]
        %v656 = vld [vmem:[%s198 + $0xb8] sm:$0xff]
        %v657 = vld [vmem:[%s198 + $0xc0] sm:$0xff]
        %v658 = vld [vmem:[%s198 + $0xc8] sm:$0xff]
        %v659 = vld [vmem:[%s198 + $0xd0] sm:$0xff]
        %v660 = vld [vmem:[%s198 + $0xd8] sm:$0xff]
        %v661 = vld [vmem:[%s198 + $0xe0] sm:$0xff]
        %v662 = vld [vmem:[%s198 + $0xe8] sm:$0xff]
        %v663 = vld [vmem:[%s198 + $0xf0] sm:$0xff]
        %v664 = vld [vmem:[%s198 + $0xf8] sm:$0xff]
        %v665 = vmax.f32 %v633, %v561
        %v666 = vmax.f32 %v634, %v562
        %v667 = vmax.f32 %v635, %v563
        %v668 = vmax.f32 %v636, %v564
        %v669 = vmax.f32 %v637, %v565
        %v670 = vmax.f32 %v638, %v566
        %v671 = vmax.f32 %v639, %v567
        %v672 = vmax.f32 %v640, %v568
        %v673 = vmax.f32 %v641, %v569
        %v674 = vmax.f32 %v642, %v570
        %v675 = vmax.f32 %v643, %v571
        %v676 = vmax.f32 %v644, %v572
        %v677 = vmax.f32 %v645, %v573
        %v678 = vmax.f32 %v646, %v574
        %v679 = vmax.f32 %v647, %v575
        %v680 = vmax.f32 %v648, %v576
        %v681 = vmax.f32 %v649, %v577
        %v682 = vmax.f32 %v650, %v578
        %v683 = vmax.f32 %v651, %v579
        %v684 = vmax.f32 %v652, %v580
        %v685 = vmax.f32 %v653, %v581
        %v686 = vmax.f32 %v654, %v582
        %v687 = vmax.f32 %v655, %v583
        %v688 = vmax.f32 %v656, %v584
        %v689 = vmax.f32 %v657, %v585
        %v690 = vmax.f32 %v658, %v586
        %v691 = vmax.f32 %v659, %v587
        %v692 = vmax.f32 %v660, %v588
        %v693 = vmax.f32 %v661, %v589
        %v694 = vmax.f32 %v662, %v590
        %v695 = vmax.f32 %v663, %v591
        %v696 = vmax.f32 %v664, %v592
        %697 = vst [vmem:[%s198] sm:$0xff] %v665
        %698 = vst [vmem:[%s198 + $0x8] sm:$0xff] %v666
        %699 = vst [vmem:[%s198 + $0x10] sm:$0xff] %v667
        %700 = vst [vmem:[%s198 + $0x18] sm:$0xff] %v668
        %701 = vst [vmem:[%s198 + $0x20] sm:$0xff] %v669
        %702 = vst [vmem:[%s198 + $0x28] sm:$0xff] %v670
        %703 = vst [vmem:[%s198 + $0x30] sm:$0xff] %v671
        %704 = vst [vmem:[%s198 + $0x38] sm:$0xff] %v672
        %705 = vst [vmem:[%s198 + $0x40] sm:$0xff] %v673
        %706 = vst [vmem:[%s198 + $0x48] sm:$0xff] %v674
        %707 = vst [vmem:[%s198 + $0x50] sm:$0xff] %v675
        %708 = vst [vmem:[%s198 + $0x58] sm:$0xff] %v676
        %709 = vst [vmem:[%s198 + $0x60] sm:$0xff] %v677
        %710 = vst [vmem:[%s198 + $0x68] sm:$0xff] %v678
        %711 = vst [vmem:[%s198 + $0x70] sm:$0xff] %v679
        %712 = vst [vmem:[%s198 + $0x78] sm:$0xff] %v680
        %713 = vst [vmem:[%s198 + $0x80] sm:$0xff] %v681
        %714 = vst [vmem:[%s198 + $0x88] sm:$0xff] %v682
        %715 = vst [vmem:[%s198 + $0x90] sm:$0xff] %v683
        %716 = vst [vmem:[%s198 + $0x98] sm:$0xff] %v684
        %717 = vst [vmem:[%s198 + $0xa0] sm:$0xff] %v685
        %718 = vst [vmem:[%s198 + $0xa8] sm:$0xff] %v686
        %719 = vst [vmem:[%s198 + $0xb0] sm:$0xff] %v687
        %720 = vst [vmem:[%s198 + $0xb8] sm:$0xff] %v688
        %721 = vst [vmem:[%s198 + $0xc0] sm:$0xff] %v689
        %722 = vst [vmem:[%s198 + $0xc8] sm:$0xff] %v690
        %723 = vst [vmem:[%s198 + $0xd0] sm:$0xff] %v691
        %724 = vst [vmem:[%s198 + $0xd8] sm:$0xff] %v692
        %725 = vst [vmem:[%s198 + $0xe0] sm:$0xff] %v693
        %726 = vst [vmem:[%s198 + $0xe8] sm:$0xff] %v694
        %727 = vst [vmem:[%s198 + $0xf0] sm:$0xff] %v695
        %728 = vst [vmem:[%s198 + $0xf8] sm:$0xff] %v696
      $region40: #{cnn_forward.3} parent=31 // pred_fallthru
        _
      %s729 = smul.u32 32, %s18
      %p730 = scmp.lt.s32.totalorder %s729, 63
      %s731 = scalar_select %p730, %s729, 63
      %s732 = smul.addr %s731, 8
      %s733 = scalar_lea.vmem %s3, %s732
      // Predicated region
      $region41: #{cnn_forward.3} parent=31 // pred_check
        %p734 = pneg %p114
      $region42: #{cnn_forward.3} parent=31 // pred_check_branch
        %736 = sbr.rel (%p734) target = $region44
      $region43: #{cnn_forward.3} parent=31 // pred_region
        %s737 = smul.u32 32, %s18
      $region44: #{cnn_forward.3} parent=31 // pred_fallthru
        _
    $region32: #{cnn_forward.3} parent=5 // pred_fallthru
      _
    %p738 = scmp.le.s32.totalorder 2, %s9
    // Predicated region
    $region45: #{cnn_forward.3} parent=5 // pred_check
      %p739 = pneg %p738
    $region46: #{cnn_forward.3} parent=5 // pred_check_branch
      %741 = sbr.rel (%p739) target = $region48
    $region47: #{cnn_forward.3} parent=5 // pred_region
      %s742 = ssub.s32 %s9, 2
      // Predicated region
      $region49: #{cnn_forward.3} parent=47 // pred_check
        %p743 = pneg %p120
      $region50: #{cnn_forward.3} parent=47 // pred_check_branch
        %745 = sbr.rel (%p743) target = $region52
      $region51: #{cnn_forward.3} parent=47 // pred_region
        %s746 = smul.u32 32, %s20
        %p747 = scmp.lt.s32.totalorder %s746, 63
        %s748 = scalar_select %p747, %s746, 63
        %s749 = smul.addr %s748, 8
        %s750 = scalar_lea.vmem %s3, %s749
      $region52: #{cnn_forward.3} parent=47 // pred_fallthru
        _
    $region48: #{cnn_forward.3} parent=5 // pred_fallthru
      _
  $region6: #{cnn_forward.3} parent=0 // loop_footer
    %s13 = sadd.s32 1, %s9
  $region7: #{cnn_forward.3} parent=0 // loop_footer_branch
    %8 = sbr.rel target = $region3
  $region8: #{cnn_forward.3} parent=0 // loop_exit
    _

// kernel: cnn_forward.4
$region0: #{cnn_forward.4}
  #allocation0 [shape = 'u32[]', space=smem, size = 0x4, offset = 0x4, fixed_abs, tag = 'smem constant byte address 0x4 - core index']
  #allocation1 [shape = 'u32[144,128]{1,0:T(1,128)}', space=vmem, size = 0x12000, scoped, tag = 'internal scratch']
  %s0 = inlined_call_operand.vmem [shape: bf16[4,128,512], index: 0, kind: input, shape index: {}]
  %s1 = inlined_call_operand.vmem [shape: bf16[512,128], index: 1, kind: input, shape index: {}]
  %s2 = inlined_call_operand.vmem [shape: f32[1,128], index: 2, kind: input, shape index: {}]
  %s3 = inlined_call_operand.vmem [shape: f32[128,128], index: 3, kind: output, shape index: {}]
  %s4 = sld [smem:[#allocation0]]
  $region53: #{cnn_forward.4} parent=0
    _
  %s6 = ssub.s32 1, %s4
  %s7 = scalar_select 0, %s6, %s4
  loop: start=0, step=1, limit=10
  $region2: #{cnn_forward.4} parent=0 // loop_pre_header
    _
  $region3: #{cnn_forward.4} parent=0 // loop_header
    %s9 = sphi 0, %s13
    %p10 = scmp.ge.s32.totalorder %s9, 10
    %s16 = sphi 0, %s28
    %s17 = sphi 0, %s24
    %s18 = sphi 0, %s16
    %s19 = sphi 0, %s17
    %s20 = sphi 0, %s18
    %s21 = sphi 0, %s19
    %s33 = sphi 0, %s35
    %s36 = sphi 0, %s33
    %s37 = sphi 0, %s36
    %s53 = sphi 0, %s37
    %s57 = sphi 0, %s57
    %s59 = sphi 0, %s57
    %s60 = sphi 0, %s59
    %s74 = sphi 0, %s60
    %s78 = sphi 0, %s78
    %s80 = sphi 0, %s78
    %s81 = sphi 0, %s80
    %s95 = sphi 0, %s81
    %s101 = sphi 0, %s103
    %s104 = sphi 0, %s101
    %s105 = sphi 0, %s104
    %s121 = sphi 0, %s105
  $region4: #{cnn_forward.4} parent=0 // loop_header_branch
    %12 = sbr.rel (%p10) target = $region8
  $region5: #{cnn_forward.4} parent=0 // loop_body
    %s14 = ssub.s32 %s9, 1
    %s15 = ssub.s32 %s9, 2
    %s22 = sadd.s32 1, %s17
    %p23 = scmp.ge.s32.totalorder %s22, 4
    %s24 = scalar_select %p23, 0, %s22
    %s25 = sadd.s32 1, %s16
    %s26 = scalar_select %p23, %s25, %s16
    %p27 = scmp.ge.s32.totalorder %s26, 2
    %s28 = scalar_select %p27, 0, %s26
    %s29 = ssub.s32 %s17, %s24
    %s30 = ssub.s32 %s16, %s28
    %s31 = sor.u32 %s29, %s30
    %p32 = scmp.eq.s32.totalorder %s31, 0
    %s34 = sadd.s32 %s33, 1
    %s35 = scalar_select %p32, %s33, %s34
    %p38 = pneg %p32
    %p39 = scmp.eq.s32.totalorder %s9, 7
    %p40 = por %p38, %p39
    %p41 = scmp.ne.s32.totalorder %s33, %s36
    %p42 = scmp.eq.s32.totalorder %s9, 0
    %p43 = por %p41, %p42
    %p44 = scmp.ne.s32.totalorder %s33, %s36
    %p45 = scmp.eq.s32.totalorder %s14, 7
    %p46 = por %p44, %p45
    %p47 = scmp.ne.s32.totalorder %s36, %s37
    %p48 = scmp.eq.s32.totalorder %s14, 0
    %p49 = por %p47, %p48
    %p50 = scmp.ne.s32.totalorder %s36, %s37
    %p51 = scmp.eq.s32.totalorder %s15, 7
    %p52 = por %p50, %p51
    %p54 = scmp.ne.s32.totalorder %s37, %s53
    %p55 = scmp.eq.s32.totalorder %s15, 0
    %p56 = por %p54, %p55
    %s58 = sadd.s32 %s57, 1
    %p61 = scmp.eq.s32.totalorder %s9, 7
    %p62 = scmp.ne.s32.totalorder %s57, %s59
    %p63 = scmp.eq.s32.totalorder %s9, 0
    %p64 = por %p62, %p63
    %p65 = scmp.ne.s32.totalorder %s57, %s59
    %p66 = scmp.eq.s32.totalorder %s14, 7
    %p67 = por %p65, %p66
    %p68 = scmp.ne.s32.totalorder %s59, %s60
    %p69 = scmp.eq.s32.totalorder %s14, 0
    %p70 = por %p68, %p69
    %p71 = scmp.ne.s32.totalorder %s59, %s60
    %p72 = scmp.eq.s32.totalorder %s15, 7
    %p73 = por %p71, %p72
    %p75 = scmp.ne.s32.totalorder %s60, %s74
    %p76 = scmp.eq.s32.totalorder %s15, 0
    %p77 = por %p75, %p76
    %s79 = sadd.s32 %s78, 1
    %p82 = scmp.eq.s32.totalorder %s9, 7
    %p83 = scmp.ne.s32.totalorder %s78, %s80
    %p84 = scmp.eq.s32.totalorder %s9, 0
    %p85 = por %p83, %p84
    %p86 = scmp.ne.s32.totalorder %s78, %s80
    %p87 = scmp.eq.s32.totalorder %s14, 7
    %p88 = por %p86, %p87
    %p89 = scmp.ne.s32.totalorder %s80, %s81
    %p90 = scmp.eq.s32.totalorder %s14, 0
    %p91 = por %p89, %p90
    %p92 = scmp.ne.s32.totalorder %s80, %s81
    %p93 = scmp.eq.s32.totalorder %s15, 7
    %p94 = por %p92, %p93
    %p96 = scmp.ne.s32.totalorder %s81, %s95
    %p97 = scmp.eq.s32.totalorder %s15, 0
    %p98 = por %p96, %p97
    %s99 = ssub.s32 %s16, %s28
    %p100 = scmp.eq.s32.totalorder %s99, 0
    %s102 = sadd.s32 %s101, 1
    %s103 = scalar_select %p100, %s101, %s102
    %p106 = pneg %p100
    %p107 = scmp.eq.s32.totalorder %s9, 7
    %p108 = por %p106, %p107
    %p109 = scmp.ne.s32.totalorder %s101, %s104
    %p110 = scmp.eq.s32.totalorder %s9, 0
    %p111 = por %p109, %p110
    %p112 = scmp.ne.s32.totalorder %s101, %s104
    %p113 = scmp.eq.s32.totalorder %s14, 7
    %p114 = por %p112, %p113
    %p115 = scmp.ne.s32.totalorder %s104, %s105
    %p116 = scmp.eq.s32.totalorder %s14, 0
    %p117 = por %p115, %p116
    %p118 = scmp.ne.s32.totalorder %s104, %s105
    %p119 = scmp.eq.s32.totalorder %s15, 7
    %p120 = por %p118, %p119
    %p122 = scmp.ne.s32.totalorder %s105, %s121
    %p123 = scmp.eq.s32.totalorder %s15, 0
    %p124 = por %p122, %p123
    %p125 = scmp.le.s32.totalorder 1, %s9
    %p126 = scmp.lt.s32.totalorder %s9, 9
    %p127 = pnand %p125, %p126
    %p128 = pneg %p127
    // Predicated region
    $region9: #{cnn_forward.4} parent=5 // pred_check
      _
    $region10: #{cnn_forward.4} parent=5 // pred_check_branch
      %130 = sbr.rel (%p127) target = $region12
    $region11: #{cnn_forward.4} parent=5 // pred_region
      %s131 = ssub.s32 %s9, 1
      // Predicated region
      $region13: #{cnn_forward.4} parent=11 // pred_check
        %p132 = pneg %p70
      $region14: #{cnn_forward.4} parent=11 // pred_check_branch
        %134 = sbr.rel (%p132) target = $region16
      $region15: #{cnn_forward.4} parent=11 // pred_region
        _
      $region16: #{cnn_forward.4} parent=11 // pred_fallthru
        _
      // Predicated region
      $region17: #{cnn_forward.4} parent=11 // pred_check
        %p135 = pneg %p91
      $region18: #{cnn_forward.4} parent=11 // pred_check_branch
        %137 = sbr.rel (%p135) target = $region20
      $region19: #{cnn_forward.4} parent=11 // pred_region
        _
      $region20: #{cnn_forward.4} parent=11 // pred_fallthru
        _
    $region12: #{cnn_forward.4} parent=5 // pred_fallthru
      _
    %p138 = scmp.lt.s32.totalorder %s9, 8
    // Predicated region
    $region21: #{cnn_forward.4} parent=5 // pred_check
      %p139 = pneg %p138
    $region22: #{cnn_forward.4} parent=5 // pred_check_branch
      %141 = sbr.rel (%p139) target = $region24
    $region23: #{cnn_forward.4} parent=5 // pred_region
      // Predicated region
      $region25: #{cnn_forward.4} parent=23 // pred_check
        %p142 = pneg %p43
      $region26: #{cnn_forward.4} parent=23 // pred_check_branch
        %144 = sbr.rel (%p142) target = $region28
      $region27: #{cnn_forward.4} parent=23 // pred_region
        %s145 = smul.u32 8, %s16
        %p146 = scmp.lt.s32.totalorder %s17, 3
        %s147 = scalar_select %p146, %s17, 3
        %p148 = scmp.lt.s32.totalorder %s145, 15
        %s149 = scalar_select %p148, %s145, 15
        %s150 = smul.addr %s149, 4
        %s151 = smul.addr %s147, 64
        %s152 = sadd.s32 %s150, %s151
        %s153 = smul.addr %s152, 4
        %s154 = scalar_lea.vmem %s0, %s153
        %s155 = smul.u32 8, %s16
      $region28: #{cnn_forward.4} parent=23 // pred_fallthru
        _
    $region24: #{cnn_forward.4} parent=5 // pred_fallthru
      _
    %p156 = scmp.le.s32.totalorder 1, %s9
    %p157 = scmp.lt.s32.totalorder %s9, 9
    %p158 = pnand %p156, %p157
    %p159 = pneg %p158
    // Predicated region
    $region29: #{cnn_forward.4} parent=5 // pred_check
      _
    $region30: #{cnn_forward.4} parent=5 // pred_check_branch
      %161 = sbr.rel (%p158) target = $region32
    $region31: #{cnn_forward.4} parent=5 // pred_region
      %s162 = ssub.s32 %s9, 1
      %s163 = smul.u32 8, %s18
      %p164 = scmp.lt.s32.totalorder %s19, 3
      %s165 = scalar_select %p164, %s19, 3
      %p166 = scmp.lt.s32.totalorder %s163, 15
      %s167 = scalar_select %p166, %s163, 15
      %s168 = smul.addr %s167, 4
      %s169 = smul.addr %s165, 64
      %s170 = sadd.s32 %s168, %s169
      %s171 = smul.addr %s170, 4
      %s172 = scalar_lea.vmem %s0, %s171
      %p173 = pneg %p49
      %p174 = pneg %p46
      %p175 = pneg %p70
      %p176 = pneg %p67
      %p177 = pneg %p91
      %p178 = pneg %p88
      %p179 = pneg %p117
      %p180 = pneg %p114
      %s181 = smul.u32 8, %s18
      %p182 = scmp.lt.s32.totalorder %s181, 15
      %s183 = scalar_select %p182, %s181, 15
      %s184 = smul.addr %s183, 8
      %s185 = scalar_lea.vmem %s3, %s184
      %s186 = smul.u32 8, %s18
      %p187 = scmp.lt.s32.totalorder %s19, 3
      %s188 = scalar_select %p187, %s19, 3
      %p189 = scmp.lt.s32.totalorder %s186, 15
      %s190 = scalar_select %p189, %s186, 15
      %s191 = smul.addr %s190, 4
      %s192 = smul.addr %s188, 64
      %s193 = sadd.s32 %s191, %s192
      %s194 = smul.addr %s193, 4
      %s195 = scalar_lea.vmem %s0, %s194
      %s196 = smul.u32 8, %s18
      %s197 = smul.u32 8, %s18
      %p198 = scmp.lt.s32.totalorder %s197, 15
      %s199 = scalar_select %p198, %s197, 15
      %s200 = smul.addr %s199, 8
      %s201 = scalar_lea.vmem %s3, %s200
      %s202 = smul.u32 8, %s18
      %v204 = vld [vmem:[%s195] sm:$0xff]
      %v205 = vld [vmem:[%s195 + $0x8] sm:$0xff]
      %v206 = vld [vmem:[%s195 + $0x10] sm:$0xff]
      %v207 = vld [vmem:[%s195 + $0x18] sm:$0xff]
      %v208 = vld [vmem:[%s195 + $0x20] sm:$0xff]
      %v209 = vld [vmem:[%s195 + $0x28] sm:$0xff]
      %v210 = vld [vmem:[%s195 + $0x30] sm:$0xff]
      %v211 = vld [vmem:[%s195 + $0x38] sm:$0xff]
      %v212 = vld [vmem:[%s195 + $0x40] sm:$0xff]
      %v213 = vld [vmem:[%s195 + $0x48] sm:$0xff]
      %v214 = vld [vmem:[%s195 + $0x50] sm:$0xff]
      %v215 = vld [vmem:[%s195 + $0x58] sm:$0xff]
      %v216 = vld [vmem:[%s195 + $0x60] sm:$0xff]
      %v217 = vld [vmem:[%s195 + $0x68] sm:$0xff]
      %v218 = vld [vmem:[%s195 + $0x70] sm:$0xff]
      %v219 = vld [vmem:[%s195 + $0x78] sm:$0xff]
      %v220 = vld [vmem:[%s1] sm:$0xf]
      %v221 = vld [vmem:[%s1 + $0x4] sm:$0xf]
      %v222 = vld [vmem:[%s1 + $0x8] sm:$0xf]
      %v223 = vld [vmem:[%s1 + $0xc] sm:$0xf]
      %v224 = vld [vmem:[%s1 + $0x10] sm:$0xf]
      %v225 = vld [vmem:[%s1 + $0x14] sm:$0xf]
      %v226 = vld [vmem:[%s1 + $0x18] sm:$0xf]
      %v227 = vld [vmem:[%s1 + $0x1c] sm:$0xf]
      %v228 = vld [vmem:[%s1 + $0x20] sm:$0xf]
      %v229 = vld [vmem:[%s1 + $0x24] sm:$0xf]
      %v230 = vld [vmem:[%s1 + $0x28] sm:$0xf]
      %v231 = vld [vmem:[%s1 + $0x2c] sm:$0xf]
      %v232 = vld [vmem:[%s1 + $0x30] sm:$0xf]
      %v233 = vld [vmem:[%s1 + $0x34] sm:$0xf]
      %v234 = vld [vmem:[%s1 + $0x38] sm:$0xf]
      %v235 = vld [vmem:[%s1 + $0x3c] sm:$0xf]
      %v236 = vld [vmem:[%s1 + $0x40] sm:$0xf]
      %v237 = vld [vmem:[%s1 + $0x44] sm:$0xf]
      %v238 = vld [vmem:[%s1 + $0x48] sm:$0xf]
      %v239 = vld [vmem:[%s1 + $0x4c] sm:$0xf]
      %v240 = vld [vmem:[%s1 + $0x50] sm:$0xf]
      %v241 = vld [vmem:[%s1 + $0x54] sm:$0xf]
      %v242 = vld [vmem:[%s1 + $0x58] sm:$0xf]
      %v243 = vld [vmem:[%s1 + $0x5c] sm:$0xf]
      %v244 = vld [vmem:[%s1 + $0x60] sm:$0xf]
      %v245 = vld [vmem:[%s1 + $0x64] sm:$0xf]
      %v246 = vld [vmem:[%s1 + $0x68] sm:$0xf]
      %v247 = vld [vmem:[%s1 + $0x6c] sm:$0xf]
      %v248 = vld [vmem:[%s1 + $0x70] sm:$0xf]
      %v249 = vld [vmem:[%s1 + $0x74] sm:$0xf]
      %v250 = vld [vmem:[%s1 + $0x78] sm:$0xf]
      %v251 = vld [vmem:[%s1 + $0x7c] sm:$0xf]
      %v252 = vld [vmem:[%s1 + $0x80] sm:$0xf]
      %v253 = vld [vmem:[%s1 + $0x84] sm:$0xf]
      %v254 = vld [vmem:[%s1 + $0x88] sm:$0xf]
      %v255 = vld [vmem:[%s1 + $0x8c] sm:$0xf]
      %v256 = vld [vmem:[%s1 + $0x90] sm:$0xf]
      %v257 = vld [vmem:[%s1 + $0x94] sm:$0xf]
      %v258 = vld [vmem:[%s1 + $0x98] sm:$0xf]
      %v259 = vld [vmem:[%s1 + $0x9c] sm:$0xf]
      %v260 = vld [vmem:[%s1 + $0xa0] sm:$0xf]
      %v261 = vld [vmem:[%s1 + $0xa4] sm:$0xf]
      %v262 = vld [vmem:[%s1 + $0xa8] sm:$0xf]
      %v263 = vld [vmem:[%s1 + $0xac] sm:$0xf]
      %v264 = vld [vmem:[%s1 + $0xb0] sm:$0xf]
      %v265 = vld [vmem:[%s1 + $0xb4] sm:$0xf]
      %v266 = vld [vmem:[%s1 + $0xb8] sm:$0xf]
      %v267 = vld [vmem:[%s1 + $0xbc] sm:$0xf]
      %v268 = vld [vmem:[%s1 + $0xc0] sm:$0xf]
      %v269 = vld [vmem:[%s1 + $0xc4] sm:$0xf]
      %v270 = vld [vmem:[%s1 + $0xc8] sm:$0xf]
      %v271 = vld [vmem:[%s1 + $0xcc] sm:$0xf]
      %v272 = vld [vmem:[%s1 + $0xd0] sm:$0xf]
      %v273 = vld [vmem:[%s1 + $0xd4] sm:$0xf]
      %v274 = vld [vmem:[%s1 + $0xd8] sm:$0xf]
      %v275 = vld [vmem:[%s1 + $0xdc] sm:$0xf]
      %v276 = vld [vmem:[%s1 + $0xe0] sm:$0xf]
      %v277 = vld [vmem:[%s1 + $0xe4] sm:$0xf]
      %v278 = vld [vmem:[%s1 + $0xe8] sm:$0xf]
      %v279 = vld [vmem:[%s1 + $0xec] sm:$0xf]
      %v280 = vld [vmem:[%s1 + $0xf0] sm:$0xf]
      %v281 = vld [vmem:[%s1 + $0xf4] sm:$0xf]
      %v282 = vld [vmem:[%s1 + $0xf8] sm:$0xf]
      %v283 = vld [vmem:[%s1 + $0xfc] sm:$0xf]
      %v284 = vld [vmem:[%s2] sm:$0x1]
      %v286 = vlaneseq
      %v287 = vshrl.u32 %v286, 7
      %v288 = vsub.s32 0, %v287
      %v289 = vrot.slane %v284, %v288
      %v307 = vunpack.c.l.b16 %v204
      %v308 = vunpack.c.h.b16 %v204
      %v309 = vunpack.c.l.b16 %v205
      %v310 = vunpack.c.h.b16 %v205
      %v311 = vunpack.c.l.b16 %v206
      %v312 = vunpack.c.h.b16 %v206
      %v313 = vunpack.c.l.b16 %v207
      %v314 = vunpack.c.h.b16 %v207
      %v315 = vunpack.c.l.b16 %v208
      %v316 = vunpack.c.h.b16 %v208
      %v317 = vunpack.c.l.b16 %v209
      %v318 = vunpack.c.h.b16 %v209
      %v319 = vunpack.c.l.b16 %v210
      %v320 = vunpack.c.h.b16 %v210
      %v321 = vunpack.c.l.b16 %v211
      %v322 = vunpack.c.h.b16 %v211
      %v323 = vunpack.c.l.b16 %v212
      %v324 = vunpack.c.h.b16 %v212
      %v325 = vunpack.c.l.b16 %v213
      %v326 = vunpack.c.h.b16 %v213
      %v327 = vunpack.c.l.b16 %v214
      %v328 = vunpack.c.h.b16 %v214
      %v329 = vunpack.c.l.b16 %v215
      %v330 = vunpack.c.h.b16 %v215
      %v331 = vunpack.c.l.b16 %v216
      %v332 = vunpack.c.h.b16 %v216
      %v333 = vunpack.c.l.b16 %v217
      %v334 = vunpack.c.h.b16 %v217
      %v335 = vunpack.c.l.b16 %v218
      %v336 = vunpack.c.h.b16 %v218
      %v337 = vunpack.c.l.b16 %v219
      %v338 = vunpack.c.h.b16 %v219
      %v339 = vpack.c.b16 %v311, %v307
      %v340 = vpack.c.b16 %v312, %v308
      %v341 = vpack.c.b16 %v313, %v309
      %v342 = vpack.c.b16 %v314, %v310
      %v343 = vpack.c.b16 %v319, %v315
      %v344 = vpack.c.b16 %v320, %v316
      %v345 = vpack.c.b16 %v321, %v317
      %v346 = vpack.c.b16 %v322, %v318
      %v347 = vpack.c.b16 %v327, %v323
      %v348 = vpack.c.b16 %v328, %v324
      %v349 = vpack.c.b16 %v329, %v325
      %v350 = vpack.c.b16 %v330, %v326
      %v351 = vpack.c.b16 %v335, %v331
      %v352 = vpack.c.b16 %v336, %v332
      %v353 = vpack.c.b16 %v337, %v333
      %v354 = vpack.c.b16 %v338, %v334
      %v435 = vunpack.c.l.b16 %v220
      %v436 = vunpack.c.l.b16 %v221
      %v437 = vunpack.c.l.b16 %v222
      %v438 = vunpack.c.l.b16 %v223
      %v439 = vunpack.c.l.b16 %v224
      %v440 = vunpack.c.l.b16 %v225
      %v441 = vunpack.c.l.b16 %v226
      %v442 = vunpack.c.l.b16 %v227
      %v443 = vunpack.c.l.b16 %v228
      %v444 = vunpack.c.l.b16 %v229
      %v445 = vunpack.c.l.b16 %v230
      %v446 = vunpack.c.l.b16 %v231
      %v447 = vunpack.c.l.b16 %v232
      %v448 = vunpack.c.l.b16 %v233
      %v449 = vunpack.c.l.b16 %v234
      %v450 = vunpack.c.l.b16 %v235
      %v451 = vunpack.c.l.b16 %v236
      %v452 = vunpack.c.l.b16 %v237
      %v453 = vunpack.c.l.b16 %v238
      %v454 = vunpack.c.l.b16 %v239
      %v455 = vunpack.c.l.b16 %v240
      %v456 = vunpack.c.l.b16 %v241
      %v457 = vunpack.c.l.b16 %v242
      %v458 = vunpack.c.l.b16 %v243
      %v459 = vunpack.c.l.b16 %v244
      %v460 = vunpack.c.l.b16 %v245
      %v461 = vunpack.c.l.b16 %v246
      %v462 = vunpack.c.l.b16 %v247
      %v463 = vunpack.c.l.b16 %v248
      %v464 = vunpack.c.l.b16 %v249
      %v465 = vunpack.c.l.b16 %v250
      %v466 = vunpack.c.l.b16 %v251
      %v467 = vunpack.c.l.b16 %v252
      %v468 = vunpack.c.l.b16 %v253
      %v469 = vunpack.c.l.b16 %v254
      %v470 = vunpack.c.l.b16 %v255
      %v471 = vunpack.c.l.b16 %v256
      %v472 = vunpack.c.l.b16 %v257
      %v473 = vunpack.c.l.b16 %v258
      %v474 = vunpack.c.l.b16 %v259
      %v475 = vunpack.c.l.b16 %v260
      %v476 = vunpack.c.l.b16 %v261
      %v477 = vunpack.c.l.b16 %v262
      %v478 = vunpack.c.l.b16 %v263
      %v479 = vunpack.c.l.b16 %v264
      %v480 = vunpack.c.l.b16 %v265
      %v481 = vunpack.c.l.b16 %v266
      %v482 = vunpack.c.l.b16 %v267
      %v483 = vunpack.c.l.b16 %v268
      %v484 = vunpack.c.l.b16 %v269
      %v485 = vunpack.c.l.b16 %v270
      %v486 = vunpack.c.l.b16 %v271
      %v487 = vunpack.c.l.b16 %v272
      %v488 = vunpack.c.l.b16 %v273
      %v489 = vunpack.c.l.b16 %v274
      %v490 = vunpack.c.l.b16 %v275
      %v491 = vunpack.c.l.b16 %v276
      %v492 = vunpack.c.l.b16 %v277
      %v493 = vunpack.c.l.b16 %v278
      %v494 = vunpack.c.l.b16 %v279
      %v495 = vunpack.c.l.b16 %v280
      %v496 = vunpack.c.l.b16 %v281
      %v497 = vunpack.c.l.b16 %v282
      %v498 = vunpack.c.l.b16 %v283
      %v499 = vpack.c.b16 %v436, %v435
      %v500 = vpack.c.b16 %v438, %v437
      %v501 = vpack.c.b16 %v440, %v439
      %v502 = vpack.c.b16 %v442, %v441
      %v503 = vpack.c.b16 %v444, %v443
      %v504 = vpack.c.b16 %v446, %v445
      %v505 = vpack.c.b16 %v448, %v447
      %v506 = vpack.c.b16 %v450, %v449
      %v507 = vpack.c.b16 %v452, %v451
      %v508 = vpack.c.b16 %v454, %v453
      %v509 = vpack.c.b16 %v456, %v455
      %v510 = vpack.c.b16 %v458, %v457
      %v511 = vpack.c.b16 %v460, %v459
      %v512 = vpack.c.b16 %v462, %v461
      %v513 = vpack.c.b16 %v464, %v463
      %v514 = vpack.c.b16 %v466, %v465
      %v515 = vpack.c.b16 %v468, %v467
      %v516 = vpack.c.b16 %v470, %v469
      %v517 = vpack.c.b16 %v472, %v471
      %v518 = vpack.c.b16 %v474, %v473
      %v519 = vpack.c.b16 %v476, %v475
      %v520 = vpack.c.b16 %v478, %v477
      %v521 = vpack.c.b16 %v480, %v479
      %v522 = vpack.c.b16 %v482, %v481
      %v523 = vpack.c.b16 %v484, %v483
      %v524 = vpack.c.b16 %v486, %v485
      %v525 = vpack.c.b16 %v488, %v487
      %v526 = vpack.c.b16 %v490, %v489
      %v527 = vpack.c.b16 %v492, %v491
      %v528 = vpack.c.b16 %v494, %v493
      %v529 = vpack.c.b16 %v496, %v495
      %v530 = vpack.c.b16 %v498, %v497
      %563 = vmatprep.subr.bf16.mxu0 0
      %564 = vmatpush1.bf16.msra.mxu0 %v499
      %565 = vmatprep.subr.bf16.mxu0 0
      %566 = vmatpush1.bf16.msra.mxu0 %v500
      %567 = vmatprep.subr.bf16.mxu0 0
      %568 = vmatpush1.bf16.msra.mxu0 %v501
      %569 = vmatprep.subr.bf16.mxu0 0
      %570 = vmatpush1.bf16.msra.mxu0 %v502
      %571 = vmatprep.subr.bf16.mxu0 0
      %572 = vmatpush1.bf16.msra.mxu0 %v503
      %573 = vmatprep.subr.bf16.mxu0 0
      %574 = vmatpush1.bf16.msra.mxu0 %v504
      %575 = vmatprep.subr.bf16.mxu0 0
      %576 = vmatpush1.bf16.msra.mxu0 %v505
      %577 = vmatprep.subr.bf16.mxu0 0
      %578 = vmatpush1.bf16.msra.mxu0 %v506
      %579 = vmatprep.subr.bf16.mxu0 0
      %580 = vmatpush1.bf16.msra.mxu0 %v507
      %581 = vmatprep.subr.bf16.mxu0 0
      %582 = vmatpush1.bf16.msra.mxu0 %v508
      %583 = vmatprep.subr.bf16.mxu0 0
      %584 = vmatpush1.bf16.msra.mxu0 %v509
      %585 = vmatprep.subr.bf16.mxu0 0
      %586 = vmatpush1.bf16.msra.mxu0 %v510
      %587 = vmatprep.subr.bf16.mxu0 0
      %588 = vmatpush1.bf16.msra.mxu0 %v511
      %589 = vmatprep.subr.bf16.mxu0 0
      %590 = vmatpush1.bf16.msra.mxu0 %v512
      %591 = vmatprep.subr.bf16.mxu0 0
      %592 = vmatpush1.bf16.msra.mxu0 %v513
      %593 = vmatprep.subr.bf16.mxu0 0
      %594 = vmatpush1.bf16.msra.mxu0 %v514
      %595 = vmatprep.mubr.bf16.mxu0 %v340
      %596 = vmatmul.mubr.bf16.gmra.mrb[0].mxu0 %v339
      %v597 = vpop.f32.mrb[0].mxu0
      %v598 = vadd.f32 %v289, %v597
      %v599 = vpop.f32.mrb[0].mxu0
      %v600 = vpop.f32.mrb[0].mxu0
      %v601 = vadd.f32 %v289, %v600
      %v602 = vpop.f32.mrb[0].mxu0
      %603 = vmatprep.mubr.bf16.mxu0 %v344
      %604 = vmatmul.mubr.bf16.gmra.mrb[0].mxu0 %v343
      %v605 = vpop.f32.mrb[0].mxu0
      %v606 = vadd.f32 %v289, %v605
      %v607 = vpop.f32.mrb[0].mxu0
      %v608 = vpop.f32.mrb[0].mxu0
      %v609 = vadd.f32 %v289, %v608
      %v610 = vpop.f32.mrb[0].mxu0
      %611 = vmatprep.mubr.bf16.mxu0 %v348
      %612 = vmatmul.mubr.bf16.gmra.mrb[0].mxu0 %v347
      %v613 = vpop.f32.mrb[0].mxu0
      %v614 = vadd.f32 %v289, %v613
      %v615 = vpop.f32.mrb[0].mxu0
      %v616 = vpop.f32.mrb[0].mxu0
      %v617 = vadd.f32 %v289, %v616
      %v618 = vpop.f32.mrb[0].mxu0
      %619 = vmatprep.mubr.bf16.mxu0 %v352
      %620 = vmatmul.mubr.bf16.gmra.mrb[0].mxu0 %v351
      %v621 = vpop.f32.mrb[0].mxu0
      %v622 = vadd.f32 %v289, %v621
      %v623 = vpop.f32.mrb[0].mxu0
      %v624 = vpop.f32.mrb[0].mxu0
      %v625 = vadd.f32 %v289, %v624
      %v626 = vpop.f32.mrb[0].mxu0
      %627 = vdwg.mxu0
      %628 = vmatprep.subr.bf16.mxu0 0
      %629 = vmatpush1.bf16.msra.mxu0 %v515
      %630 = vmatprep.subr.bf16.mxu0 0
      %631 = vmatpush1.bf16.msra.mxu0 %v516
      %632 = vmatprep.subr.bf16.mxu0 0
      %633 = vmatpush1.bf16.msra.mxu0 %v517
      %634 = vmatprep.subr.bf16.mxu0 0
      %635 = vmatpush1.bf16.msra.mxu0 %v518
      %636 = vmatprep.subr.bf16.mxu0 0
      %637 = vmatpush1.bf16.msra.mxu0 %v519
      %638 = vmatprep.subr.bf16.mxu0 0
      %639 = vmatpush1.bf16.msra.mxu0 %v520
      %640 = vmatprep.subr.bf16.mxu0 0
      %641 = vmatpush1.bf16.msra.mxu0 %v521
      %642 = vmatprep.subr.bf16.mxu0 0
      %643 = vmatpush1.bf16.msra.mxu0 %v522
      %644 = vmatprep.subr.bf16.mxu0 0
      %645 = vmatpush1.bf16.msra.mxu0 %v523
      %646 = vmatprep.subr.bf16.mxu0 0
      %647 = vmatpush1.bf16.msra.mxu0 %v524
      %648 = vmatprep.subr.bf16.mxu0 0
      %649 = vmatpush1.bf16.msra.mxu0 %v525
      %650 = vmatprep.subr.bf16.mxu0 0
      %651 = vmatpush1.bf16.msra.mxu0 %v526
      %652 = vmatprep.subr.bf16.mxu0 0
      %653 = vmatpush1.bf16.msra.mxu0 %v527
      %654 = vmatprep.subr.bf16.mxu0 0
      %655 = vmatpush1.bf16.msra.mxu0 %v528
      %656 = vmatprep.subr.bf16.mxu0 0
      %657 = vmatpush1.bf16.msra.mxu0 %v529
      %658 = vmatprep.subr.bf16.mxu0 0
      %659 = vmatpush1.bf16.msra.mxu0 %v530
      %660 = vmatprep.mubr.bf16.mxu0 %v342
      %661 = vmatmul.mubr.bf16.gmra.mrb[0].mxu0 %v341
      %v662 = vpop.f32.mrb[0].mxu0
      %v663 = vadd.f32 %v598, %v662
      %v664 = vpop.f32.mrb[0].mxu0
      %v665 = vpop.f32.mrb[0].mxu0
      %v666 = vadd.f32 %v601, %v665
      %v667 = vpop.f32.mrb[0].mxu0
      %668 = vmatprep.mubr.bf16.mxu0 %v346
      %669 = vmatmul.mubr.bf16.gmra.mrb[0].mxu0 %v345
      %v670 = vpop.f32.mrb[0].mxu0
      %v671 = vadd.f32 %v606, %v670
      %v672 = vpop.f32.mrb[0].mxu0
      %v673 = vpop.f32.mrb[0].mxu0
      %v674 = vadd.f32 %v609, %v673
      %v675 = vpop.f32.mrb[0].mxu0
      %676 = vmatprep.mubr.bf16.mxu0 %v350
      %677 = vmatmul.mubr.bf16.gmra.mrb[0].mxu0 %v349
      %v678 = vpop.f32.mrb[0].mxu0
      %v679 = vadd.f32 %v614, %v678
      %v680 = vpop.f32.mrb[0].mxu0
      %v681 = vpop.f32.mrb[0].mxu0
      %v682 = vadd.f32 %v617, %v681
      %v683 = vpop.f32.mrb[0].mxu0
      %684 = vmatprep.mubr.bf16.mxu0 %v354
      %685 = vmatmul.mubr.bf16.gmra.mrb[0].mxu0 %v353
      %v686 = vpop.f32.mrb[0].mxu0
      %v687 = vadd.f32 %v622, %v686
      %v688 = vpop.f32.mrb[0].mxu0
      %v689 = vpop.f32.mrb[0].mxu0
      %v690 = vadd.f32 %v625, %v689
      %v691 = vpop.f32.mrb[0].mxu0
      %692 = vdwg.mxu0
      %v693 = vmax.f32 %v663, 0.0
      %v694 = vmax.f32 %v666, 0.0
      %v695 = vmax.f32 %v671, 0.0
      %v696 = vmax.f32 %v674, 0.0
      %v697 = vmax.f32 %v679, 0.0
      %v698 = vmax.f32 %v682, 0.0
      %v699 = vmax.f32 %v687, 0.0
      %v700 = vmax.f32 %v690, 0.0
      %p701 = scmp.eq.s32.totalorder %s19, 0
      // Predicated region
      $region33: #{cnn_forward.4} parent=31 // pred_check
        %p702 = pneg %p701
      $region34: #{cnn_forward.4} parent=31 // pred_check_branch
        %704 = sbr.rel (%p702) target = $region36
      $region35: #{cnn_forward.4} parent=31 // pred_region
        %705 = vst [vmem:[%s201] sm:$0xff] %v693
        %706 = vst [vmem:[%s201 + $0x8] sm:$0xff] %v694
        %707 = vst [vmem:[%s201 + $0x10] sm:$0xff] %v695
        %708 = vst [vmem:[%s201 + $0x18] sm:$0xff] %v696
        %709 = vst [vmem:[%s201 + $0x20] sm:$0xff] %v697
        %710 = vst [vmem:[%s201 + $0x28] sm:$0xff] %v698
        %711 = vst [vmem:[%s201 + $0x30] sm:$0xff] %v699
        %712 = vst [vmem:[%s201 + $0x38] sm:$0xff] %v700
      $region36: #{cnn_forward.4} parent=31 // pred_fallthru
        _
      %p713 = scmp.gt.s32.totalorder %s19, 0
      // Predicated region
      $region37: #{cnn_forward.4} parent=31 // pred_check
        %p714 = pneg %p713
      $region38: #{cnn_forward.4} parent=31 // pred_check_branch
        %716 = sbr.rel (%p714) target = $region40
      $region39: #{cnn_forward.4} parent=31 // pred_region
        %v717 = vld [vmem:[%s201] sm:$0xff]
        %v718 = vld [vmem:[%s201 + $0x8] sm:$0xff]
        %v719 = vld [vmem:[%s201 + $0x10] sm:$0xff]
        %v720 = vld [vmem:[%s201 + $0x18] sm:$0xff]
        %v721 = vld [vmem:[%s201 + $0x20] sm:$0xff]
        %v722 = vld [vmem:[%s201 + $0x28] sm:$0xff]
        %v723 = vld [vmem:[%s201 + $0x30] sm:$0xff]
        %v724 = vld [vmem:[%s201 + $0x38] sm:$0xff]
        %v725 = vmax.f32 %v717, %v693
        %v726 = vmax.f32 %v718, %v694
        %v727 = vmax.f32 %v719, %v695
        %v728 = vmax.f32 %v720, %v696
        %v729 = vmax.f32 %v721, %v697
        %v730 = vmax.f32 %v722, %v698
        %v731 = vmax.f32 %v723, %v699
        %v732 = vmax.f32 %v724, %v700
        %733 = vst [vmem:[%s201] sm:$0xff] %v725
        %734 = vst [vmem:[%s201 + $0x8] sm:$0xff] %v726
        %735 = vst [vmem:[%s201 + $0x10] sm:$0xff] %v727
        %736 = vst [vmem:[%s201 + $0x18] sm:$0xff] %v728
        %737 = vst [vmem:[%s201 + $0x20] sm:$0xff] %v729
        %738 = vst [vmem:[%s201 + $0x28] sm:$0xff] %v730
        %739 = vst [vmem:[%s201 + $0x30] sm:$0xff] %v731
        %740 = vst [vmem:[%s201 + $0x38] sm:$0xff] %v732
      $region40: #{cnn_forward.4} parent=31 // pred_fallthru
        _
      %s741 = smul.u32 8, %s18
      %p742 = scmp.lt.s32.totalorder %s741, 15
      %s743 = scalar_select %p742, %s741, 15
      %s744 = smul.addr %s743, 8
      %s745 = scalar_lea.vmem %s3, %s744
      // Predicated region
      $region41: #{cnn_forward.4} parent=31 // pred_check
        %p746 = pneg %p114
      $region42: #{cnn_forward.4} parent=31 // pred_check_branch
        %748 = sbr.rel (%p746) target = $region44
      $region43: #{cnn_forward.4} parent=31 // pred_region
        %s749 = smul.u32 8, %s18
      $region44: #{cnn_forward.4} parent=31 // pred_fallthru
        _
    $region32: #{cnn_forward.4} parent=5 // pred_fallthru
      _
    %p750 = scmp.le.s32.totalorder 2, %s9
    // Predicated region
    $region45: #{cnn_forward.4} parent=5 // pred_check
      %p751 = pneg %p750
    $region46: #{cnn_forward.4} parent=5 // pred_check_branch
      %753 = sbr.rel (%p751) target = $region48
    $region47: #{cnn_forward.4} parent=5 // pred_region
      %s754 = ssub.s32 %s9, 2
      // Predicated region
      $region49: #{cnn_forward.4} parent=47 // pred_check
        %p755 = pneg %p120
      $region50: #{cnn_forward.4} parent=47 // pred_check_branch
        %757 = sbr.rel (%p755) target = $region52
      $region51: #{cnn_forward.4} parent=47 // pred_region
        %s758 = smul.u32 8, %s20
        %p759 = scmp.lt.s32.totalorder %s758, 15
        %s760 = scalar_select %p759, %s758, 15
        %s761 = smul.addr %s760, 8
        %s762 = scalar_lea.vmem %s3, %s761
      $region52: #{cnn_forward.4} parent=47 // pred_fallthru
        _
    $region48: #{cnn_forward.4} parent=5 // pred_fallthru
      _
  $region6: #{cnn_forward.4} parent=0 // loop_footer
    %s13 = sadd.s32 1, %s9
  $region7: #{cnn_forward.4} parent=0 // loop_footer_branch
    %8 = sbr.rel target = $region3
  $region8: #{cnn_forward.4} parent=0 // loop_exit
    _

// kernel: cnn_forward.5
$region0: #{cnn_forward.5}
  #allocation0 [shape = 'u32[]', space=smem, size = 0x4, offset = 0x4, fixed_abs, tag = 'smem constant byte address 0x4 - core index']
  #allocation1 [shape = 'u32[144,128]{1,0:T(1,128)}', space=vmem, size = 0x12000, scoped, tag = 'internal scratch']
  %s0 = inlined_call_operand.vmem [shape: bf16[8,1568], index: 0, kind: input, shape index: {}]
  %s1 = inlined_call_operand.vmem [shape: bf16[1568,128], index: 1, kind: input, shape index: {}]
  %s2 = inlined_call_operand.vmem [shape: f32[1,128], index: 2, kind: input, shape index: {}]
  %s3 = inlined_call_operand.vmem [shape: f32[8,128], index: 3, kind: output, shape index: {}]
  %s4 = sld [smem:[#allocation0]]
  $region22: #{cnn_forward.5} parent=0
    _
  %s6 = ssub.s32 1, %s4
  %s7 = scalar_select 0, %s6, %s4
  // Predicated region
  $region2: #{cnn_forward.5} parent=0 // pred_check
    _
  $region3: #{cnn_forward.5} parent=0 // pred_check_branch
    %9 = sbr.rel (0) target = $region5
  $region4: #{cnn_forward.5} parent=0 // pred_region
    _
  $region5: #{cnn_forward.5} parent=0 // pred_fallthru
    _
  // Predicated region
  $region6: #{cnn_forward.5} parent=0 // pred_check
    _
  $region7: #{cnn_forward.5} parent=0 // pred_check_branch
    %11 = sbr.rel (0) target = $region9
  $region8: #{cnn_forward.5} parent=0 // pred_region
    _
  $region9: #{cnn_forward.5} parent=0 // pred_fallthru
    _
  // Predicated region
  $region10: #{cnn_forward.5} parent=0 // pred_check
    _
  $region11: #{cnn_forward.5} parent=0 // pred_check_branch
    %13 = sbr.rel (0) target = $region13
  $region12: #{cnn_forward.5} parent=0 // pred_region
    _
  $region13: #{cnn_forward.5} parent=0 // pred_fallthru
    _
  %v15 = vld [vmem:[%s0] sm:$0xff]
  %v16 = vld [vmem:[%s0 + $0x8] sm:$0xff]
  %v17 = vld [vmem:[%s0 + $0x10] sm:$0xff]
  %v18 = vld [vmem:[%s0 + $0x18] sm:$0xff]
  %v19 = vld [vmem:[%s0 + $0x20] sm:$0xff]
  %v20 = vld [vmem:[%s0 + $0x28] sm:$0xff]
  %v21 = vld [vmem:[%s0 + $0x30] sm:$0xf]
  %v22 = vld [vmem:[%s1] sm:$0xf]
  %v23 = vld [vmem:[%s1 + $0x4] sm:$0xf]
  %v24 = vld [vmem:[%s1 + $0x8] sm:$0xf]
  %v25 = vld [vmem:[%s1 + $0xc] sm:$0xf]
  %v26 = vld [vmem:[%s1 + $0x10] sm:$0xf]
  %v27 = vld [vmem:[%s1 + $0x14] sm:$0xf]
  %v28 = vld [vmem:[%s1 + $0x18] sm:$0xf]
  %v29 = vld [vmem:[%s1 + $0x1c] sm:$0xf]
  %v30 = vld [vmem:[%s1 + $0x20] sm:$0xf]
  %v31 = vld [vmem:[%s1 + $0x24] sm:$0xf]
  %v32 = vld [vmem:[%s1 + $0x28] sm:$0xf]
  %v33 = vld [vmem:[%s1 + $0x2c] sm:$0xf]
  %v34 = vld [vmem:[%s1 + $0x30] sm:$0xf]
  %v35 = vld [vmem:[%s1 + $0x34] sm:$0xf]
  %v36 = vld [vmem:[%s1 + $0x38] sm:$0xf]
  %v37 = vld [vmem:[%s1 + $0x3c] sm:$0xf]
  %v38 = vld [vmem:[%s1 + $0x40] sm:$0xf]
  %v39 = vld [vmem:[%s1 + $0x44] sm:$0xf]
  %v40 = vld [vmem:[%s1 + $0x48] sm:$0xf]
  %v41 = vld [vmem:[%s1 + $0x4c] sm:$0xf]
  %v42 = vld [vmem:[%s1 + $0x50] sm:$0xf]
  %v43 = vld [vmem:[%s1 + $0x54] sm:$0xf]
  %v44 = vld [vmem:[%s1 + $0x58] sm:$0xf]
  %v45 = vld [vmem:[%s1 + $0x5c] sm:$0xf]
  %v46 = vld [vmem:[%s1 + $0x60] sm:$0xf]
  %v47 = vld [vmem:[%s1 + $0x64] sm:$0xf]
  %v48 = vld [vmem:[%s1 + $0x68] sm:$0xf]
  %v49 = vld [vmem:[%s1 + $0x6c] sm:$0xf]
  %v50 = vld [vmem:[%s1 + $0x70] sm:$0xf]
  %v51 = vld [vmem:[%s1 + $0x74] sm:$0xf]
  %v52 = vld [vmem:[%s1 + $0x78] sm:$0xf]
  %v53 = vld [vmem:[%s1 + $0x7c] sm:$0xf]
  %v54 = vld [vmem:[%s1 + $0x80] sm:$0xf]
  %v55 = vld [vmem:[%s1 + $0x84] sm:$0xf]
  %v56 = vld [vmem:[%s1 + $0x88] sm:$0xf]
  %v57 = vld [vmem:[%s1 + $0x8c] sm:$0xf]
  %v58 = vld [vmem:[%s1 + $0x90] sm:$0xf]
  %v59 = vld [vmem:[%s1 + $0x94] sm:$0xf]
  %v60 = vld [vmem:[%s1 + $0x98] sm:$0xf]
  %v61 = vld [vmem:[%s1 + $0x9c] sm:$0xf]
  %v62 = vld [vmem:[%s1 + $0xa0] sm:$0xf]
  %v63 = vld [vmem:[%s1 + $0xa4] sm:$0xf]
  %v64 = vld [vmem:[%s1 + $0xa8] sm:$0xf]
  %v65 = vld [vmem:[%s1 + $0xac] sm:$0xf]
  %v66 = vld [vmem:[%s1 + $0xb0] sm:$0xf]
  %v67 = vld [vmem:[%s1 + $0xb4] sm:$0xf]
  %v68 = vld [vmem:[%s1 + $0xb8] sm:$0xf]
  %v69 = vld [vmem:[%s1 + $0xbc] sm:$0xf]
  %v70 = vld [vmem:[%s1 + $0xc0] sm:$0xf]
  %v71 = vld [vmem:[%s1 + $0xc4] sm:$0xf]
  %v72 = vld [vmem:[%s1 + $0xc8] sm:$0xf]
  %v73 = vld [vmem:[%s1 + $0xcc] sm:$0xf]
  %v74 = vld [vmem:[%s1 + $0xd0] sm:$0xf]
  %v75 = vld [vmem:[%s1 + $0xd4] sm:$0xf]
  %v76 = vld [vmem:[%s1 + $0xd8] sm:$0xf]
  %v77 = vld [vmem:[%s1 + $0xdc] sm:$0xf]
  %v78 = vld [vmem:[%s1 + $0xe0] sm:$0xf]
  %v79 = vld [vmem:[%s1 + $0xe4] sm:$0xf]
  %v80 = vld [vmem:[%s1 + $0xe8] sm:$0xf]
  %v81 = vld [vmem:[%s1 + $0xec] sm:$0xf]
  %v82 = vld [vmem:[%s1 + $0xf0] sm:$0xf]
  %v83 = vld [vmem:[%s1 + $0xf4] sm:$0xf]
  %v84 = vld [vmem:[%s1 + $0xf8] sm:$0xf]
  %v85 = vld [vmem:[%s1 + $0xfc] sm:$0xf]
  %v86 = vld [vmem:[%s1 + $0x100] sm:$0xf]
  %v87 = vld [vmem:[%s1 + $0x104] sm:$0xf]
  %v88 = vld [vmem:[%s1 + $0x108] sm:$0xf]
  %v89 = vld [vmem:[%s1 + $0x10c] sm:$0xf]
  %v90 = vld [vmem:[%s1 + $0x110] sm:$0xf]
  %v91 = vld [vmem:[%s1 + $0x114] sm:$0xf]
  %v92 = vld [vmem:[%s1 + $0x118] sm:$0xf]
  %v93 = vld [vmem:[%s1 + $0x11c] sm:$0xf]
  %v94 = vld [vmem:[%s1 + $0x120] sm:$0xf]
  %v95 = vld [vmem:[%s1 + $0x124] sm:$0xf]
  %v96 = vld [vmem:[%s1 + $0x128] sm:$0xf]
  %v97 = vld [vmem:[%s1 + $0x12c] sm:$0xf]
  %v98 = vld [vmem:[%s1 + $0x130] sm:$0xf]
  %v99 = vld [vmem:[%s1 + $0x134] sm:$0xf]
  %v100 = vld [vmem:[%s1 + $0x138] sm:$0xf]
  %v101 = vld [vmem:[%s1 + $0x13c] sm:$0xf]
  %v102 = vld [vmem:[%s1 + $0x140] sm:$0xf]
  %v103 = vld [vmem:[%s1 + $0x144] sm:$0xf]
  %v104 = vld [vmem:[%s1 + $0x148] sm:$0xf]
  %v105 = vld [vmem:[%s1 + $0x14c] sm:$0xf]
  %v106 = vld [vmem:[%s1 + $0x150] sm:$0xf]
  %v107 = vld [vmem:[%s1 + $0x154] sm:$0xf]
  %v108 = vld [vmem:[%s1 + $0x158] sm:$0xf]
  %v109 = vld [vmem:[%s1 + $0x15c] sm:$0xf]
  %v110 = vld [vmem:[%s1 + $0x160] sm:$0xf]
  %v111 = vld [vmem:[%s1 + $0x164] sm:$0xf]
  %v112 = vld [vmem:[%s1 + $0x168] sm:$0xf]
  %v113 = vld [vmem:[%s1 + $0x16c] sm:$0xf]
  %v114 = vld [vmem:[%s1 + $0x170] sm:$0xf]
  %v115 = vld [vmem:[%s1 + $0x174] sm:$0xf]
  %v116 = vld [vmem:[%s1 + $0x178] sm:$0xf]
  %v117 = vld [vmem:[%s1 + $0x17c] sm:$0xf]
  %v118 = vld [vmem:[%s1 + $0x180] sm:$0xf]
  %v119 = vld [vmem:[%s1 + $0x184] sm:$0xf]
  %v120 = vld [vmem:[%s1 + $0x188] sm:$0xf]
  %v121 = vld [vmem:[%s1 + $0x18c] sm:$0xf]
  %v122 = vld [vmem:[%s1 + $0x190] sm:$0xf]
  %v123 = vld [vmem:[%s1 + $0x194] sm:$0xf]
  %v124 = vld [vmem:[%s1 + $0x198] sm:$0xf]
  %v125 = vld [vmem:[%s1 + $0x19c] sm:$0xf]
  %v126 = vld [vmem:[%s1 + $0x1a0] sm:$0xf]
  %v127 = vld [vmem:[%s1 + $0x1a4] sm:$0xf]
  %v128 = vld [vmem:[%s1 + $0x1a8] sm:$0xf]
  %v129 = vld [vmem:[%s1 + $0x1ac] sm:$0xf]
  %v130 = vld [vmem:[%s1 + $0x1b0] sm:$0xf]
  %v131 = vld [vmem:[%s1 + $0x1b4] sm:$0xf]
  %v132 = vld [vmem:[%s1 + $0x1b8] sm:$0xf]
  %v133 = vld [vmem:[%s1 + $0x1bc] sm:$0xf]
  %v134 = vld [vmem:[%s1 + $0x1c0] sm:$0xf]
  %v135 = vld [vmem:[%s1 + $0x1c4] sm:$0xf]
  %v136 = vld [vmem:[%s1 + $0x1c8] sm:$0xf]
  %v137 = vld [vmem:[%s1 + $0x1cc] sm:$0xf]
  %v138 = vld [vmem:[%s1 + $0x1d0] sm:$0xf]
  %v139 = vld [vmem:[%s1 + $0x1d4] sm:$0xf]
  %v140 = vld [vmem:[%s1 + $0x1d8] sm:$0xf]
  %v141 = vld [vmem:[%s1 + $0x1dc] sm:$0xf]
  %v142 = vld [vmem:[%s1 + $0x1e0] sm:$0xf]
  %v143 = vld [vmem:[%s1 + $0x1e4] sm:$0xf]
  %v144 = vld [vmem:[%s1 + $0x1e8] sm:$0xf]
  %v145 = vld [vmem:[%s1 + $0x1ec] sm:$0xf]
  %v146 = vld [vmem:[%s1 + $0x1f0] sm:$0xf]
  %v147 = vld [vmem:[%s1 + $0x1f4] sm:$0xf]
  %v148 = vld [vmem:[%s1 + $0x1f8] sm:$0xf]
  %v149 = vld [vmem:[%s1 + $0x1fc] sm:$0xf]
  %v150 = vld [vmem:[%s1 + $0x200] sm:$0xf]
  %v151 = vld [vmem:[%s1 + $0x204] sm:$0xf]
  %v152 = vld [vmem:[%s1 + $0x208] sm:$0xf]
  %v153 = vld [vmem:[%s1 + $0x20c] sm:$0xf]
  %v154 = vld [vmem:[%s1 + $0x210] sm:$0xf]
  %v155 = vld [vmem:[%s1 + $0x214] sm:$0xf]
  %v156 = vld [vmem:[%s1 + $0x218] sm:$0xf]
  %v157 = vld [vmem:[%s1 + $0x21c] sm:$0xf]
  %v158 = vld [vmem:[%s1 + $0x220] sm:$0xf]
  %v159 = vld [vmem:[%s1 + $0x224] sm:$0xf]
  %v160 = vld [vmem:[%s1 + $0x228] sm:$0xf]
  %v161 = vld [vmem:[%s1 + $0x22c] sm:$0xf]
  %v162 = vld [vmem:[%s1 + $0x230] sm:$0xf]
  %v163 = vld [vmem:[%s1 + $0x234] sm:$0xf]
  %v164 = vld [vmem:[%s1 + $0x238] sm:$0xf]
  %v165 = vld [vmem:[%s1 + $0x23c] sm:$0xf]
  %v166 = vld [vmem:[%s1 + $0x240] sm:$0xf]
  %v167 = vld [vmem:[%s1 + $0x244] sm:$0xf]
  %v168 = vld [vmem:[%s1 + $0x248] sm:$0xf]
  %v169 = vld [vmem:[%s1 + $0x24c] sm:$0xf]
  %v170 = vld [vmem:[%s1 + $0x250] sm:$0xf]
  %v171 = vld [vmem:[%s1 + $0x254] sm:$0xf]
  %v172 = vld [vmem:[%s1 + $0x258] sm:$0xf]
  %v173 = vld [vmem:[%s1 + $0x25c] sm:$0xf]
  %v174 = vld [vmem:[%s1 + $0x260] sm:$0xf]
  %v175 = vld [vmem:[%s1 + $0x264] sm:$0xf]
  %v176 = vld [vmem:[%s1 + $0x268] sm:$0xf]
  %v177 = vld [vmem:[%s1 + $0x26c] sm:$0xf]
  %v178 = vld [vmem:[%s1 + $0x270] sm:$0xf]
  %v179 = vld [vmem:[%s1 + $0x274] sm:$0xf]
  %v180 = vld [vmem:[%s1 + $0x278] sm:$0xf]
  %v181 = vld [vmem:[%s1 + $0x27c] sm:$0xf]
  %v182 = vld [vmem:[%s1 + $0x280] sm:$0xf]
  %v183 = vld [vmem:[%s1 + $0x284] sm:$0xf]
  %v184 = vld [vmem:[%s1 + $0x288] sm:$0xf]
  %v185 = vld [vmem:[%s1 + $0x28c] sm:$0xf]
  %v186 = vld [vmem:[%s1 + $0x290] sm:$0xf]
  %v187 = vld [vmem:[%s1 + $0x294] sm:$0xf]
  %v188 = vld [vmem:[%s1 + $0x298] sm:$0xf]
  %v189 = vld [vmem:[%s1 + $0x29c] sm:$0xf]
  %v190 = vld [vmem:[%s1 + $0x2a0] sm:$0xf]
  %v191 = vld [vmem:[%s1 + $0x2a4] sm:$0xf]
  %v192 = vld [vmem:[%s1 + $0x2a8] sm:$0xf]
  %v193 = vld [vmem:[%s1 + $0x2ac] sm:$0xf]
  %v194 = vld [vmem:[%s1 + $0x2b0] sm:$0xf]
  %v195 = vld [vmem:[%s1 + $0x2b4] sm:$0xf]
  %v196 = vld [vmem:[%s1 + $0x2b8] sm:$0xf]
  %v197 = vld [vmem:[%s1 + $0x2bc] sm:$0xf]
  %v198 = vld [vmem:[%s1 + $0x2c0] sm:$0xf]
  %v199 = vld [vmem:[%s1 + $0x2c4] sm:$0xf]
  %v200 = vld [vmem:[%s1 + $0x2c8] sm:$0xf]
  %v201 = vld [vmem:[%s1 + $0x2cc] sm:$0xf]
  %v202 = vld [vmem:[%s1 + $0x2d0] sm:$0xf]
  %v203 = vld [vmem:[%s1 + $0x2d4] sm:$0xf]
  %v204 = vld [vmem:[%s1 + $0x2d8] sm:$0xf]
  %v205 = vld [vmem:[%s1 + $0x2dc] sm:$0xf]
  %v206 = vld [vmem:[%s1 + $0x2e0] sm:$0xf]
  %v207 = vld [vmem:[%s1 + $0x2e4] sm:$0xf]
  %v208 = vld [vmem:[%s1 + $0x2e8] sm:$0xf]
  %v209 = vld [vmem:[%s1 + $0x2ec] sm:$0xf]
  %v210 = vld [vmem:[%s1 + $0x2f0] sm:$0xf]
  %v211 = vld [vmem:[%s1 + $0x2f4] sm:$0xf]
  %v212 = vld [vmem:[%s1 + $0x2f8] sm:$0xf]
  %v213 = vld [vmem:[%s1 + $0x2fc] sm:$0xf]
  %v214 = vld [vmem:[%s1 + $0x300] sm:$0xf]
  %v215 = vld [vmem:[%s1 + $0x304] sm:$0xf]
  %v216 = vld [vmem:[%s1 + $0x308] sm:$0xf]
  %v217 = vld [vmem:[%s1 + $0x30c] sm:$0xf]
  %v218 = vld [vmem:[%s2] sm:$0x1]
  %v220 = vlaneseq
  %v221 = vshrl.u32 %v220, 7
  %v222 = vsub.s32 0, %v221
  %v223 = vrot.slane %v218, %v222
  %v232 = vunpack.c.l.b16 %v15
  %v233 = vunpack.c.h.b16 %v15
  %v234 = vunpack.c.l.b16 %v16
  %v235 = vunpack.c.h.b16 %v16
  %v236 = vunpack.c.l.b16 %v17
  %v237 = vunpack.c.h.b16 %v17
  %v238 = vunpack.c.l.b16 %v18
  %v239 = vunpack.c.h.b16 %v18
  %v240 = vunpack.c.l.b16 %v19
  %v241 = vunpack.c.h.b16 %v19
  %v242 = vunpack.c.l.b16 %v20
  %v243 = vunpack.c.h.b16 %v20
  %v244 = vunpack.c.l.b16 %v21
  %v245 = vpack.c.b16 %v232, %v232
  %v246 = vpack.c.b16 %v233, %v233
  %v247 = vpack.c.b16 %v234, %v234
  %v248 = vpack.c.b16 %v235, %v235
  %v249 = vpack.c.b16 %v236, %v236
  %v250 = vpack.c.b16 %v237, %v237
  %v251 = vpack.c.b16 %v238, %v238
  %v252 = vpack.c.b16 %v239, %v239
  %v253 = vpack.c.b16 %v240, %v240
  %v254 = vpack.c.b16 %v241, %v241
  %v255 = vpack.c.b16 %v242, %v242
  %v256 = vpack.c.b16 %v243, %v243
  %v257 = vpack.c.b16 %v244, %v244
  %v466 = vunpack.c.l.b16 %v22
  %v467 = vunpack.c.l.b16 %v23
  %v468 = vunpack.c.l.b16 %v24
  %v469 = vunpack.c.l.b16 %v25
  %v470 = vunpack.c.l.b16 %v26
  %v471 = vunpack.c.l.b16 %v27
  %v472 = vunpack.c.l.b16 %v28
  %v473 = vunpack.c.l.b16 %v29
  %v474 = vunpack.c.l.b16 %v30
  %v475 = vunpack.c.l.b16 %v31
  %v476 = vunpack.c.l.b16 %v32
  %v477 = vunpack.c.l.b16 %v33
  %v478 = vunpack.c.l.b16 %v34
  %v479 = vunpack.c.l.b16 %v35
  %v480 = vunpack.c.l.b16 %v36
  %v481 = vunpack.c.l.b16 %v37
  %v482 = vunpack.c.l.b16 %v38
  %v483 = vunpack.c.l.b16 %v39
  %v484 = vunpack.c.l.b16 %v40
  %v485 = vunpack.c.l.b16 %v41
  %v486 = vunpack.c.l.b16 %v42
  %v487 = vunpack.c.l.b16 %v43
  %v488 = vunpack.c.l.b16 %v44
  %v489 = vunpack.c.l.b16 %v45
  %v490 = vunpack.c.l.b16 %v46
  %v491 = vunpack.c.l.b16 %v47
  %v492 = vunpack.c.l.b16 %v48
  %v493 = vunpack.c.l.b16 %v49
  %v494 = vunpack.c.l.b16 %v50
  %v495 = vunpack.c.l.b16 %v51
  %v496 = vunpack.c.l.b16 %v52
  %v497 = vunpack.c.l.b16 %v53
  %v498 = vunpack.c.l.b16 %v54
  %v499 = vunpack.c.l.b16 %v55
  %v500 = vunpack.c.l.b16 %v56
  %v501 = vunpack.c.l.b16 %v57
  %v502 = vunpack.c.l.b16 %v58
  %v503 = vunpack.c.l.b16 %v59
  %v504 = vunpack.c.l.b16 %v60
  %v505 = vunpack.c.l.b16 %v61
  %v506 = vunpack.c.l.b16 %v62
  %v507 = vunpack.c.l.b16 %v63
  %v508 = vunpack.c.l.b16 %v64
  %v509 = vunpack.c.l.b16 %v65
  %v510 = vunpack.c.l.b16 %v66
  %v511 = vunpack.c.l.b16 %v67
  %v512 = vunpack.c.l.b16 %v68
  %v513 = vunpack.c.l.b16 %v69
  %v514 = vunpack.c.l.b16 %v70
  %v515 = vunpack.c.l.b16 %v71
  %v516 = vunpack.c.l.b16 %v72
  %v517 = vunpack.c.l.b16 %v73
  %v518 = vunpack.c.l.b16 %v74
  %v519 = vunpack.c.l.b16 %v75
  %v520 = vunpack.c.l.b16 %v76
  %v521 = vunpack.c.l.b16 %v77
  %v522 = vunpack.c.l.b16 %v78
  %v523 = vunpack.c.l.b16 %v79
  %v524 = vunpack.c.l.b16 %v80
  %v525 = vunpack.c.l.b16 %v81
  %v526 = vunpack.c.l.b16 %v82
  %v527 = vunpack.c.l.b16 %v83
  %v528 = vunpack.c.l.b16 %v84
  %v529 = vunpack.c.l.b16 %v85
  %v530 = vunpack.c.l.b16 %v86
  %v531 = vunpack.c.l.b16 %v87
  %v532 = vunpack.c.l.b16 %v88
  %v533 = vunpack.c.l.b16 %v89
  %v534 = vunpack.c.l.b16 %v90
  %v535 = vunpack.c.l.b16 %v91
  %v536 = vunpack.c.l.b16 %v92
  %v537 = vunpack.c.l.b16 %v93
  %v538 = vunpack.c.l.b16 %v94
  %v539 = vunpack.c.l.b16 %v95
  %v540 = vunpack.c.l.b16 %v96
  %v541 = vunpack.c.l.b16 %v97
  %v542 = vunpack.c.l.b16 %v98
  %v543 = vunpack.c.l.b16 %v99
  %v544 = vunpack.c.l.b16 %v100
  %v545 = vunpack.c.l.b16 %v101
  %v546 = vunpack.c.l.b16 %v102
  %v547 = vunpack.c.l.b16 %v103
  %v548 = vunpack.c.l.b16 %v104
  %v549 = vunpack.c.l.b16 %v105
  %v550 = vunpack.c.l.b16 %v106
  %v551 = vunpack.c.l.b16 %v107
  %v552 = vunpack.c.l.b16 %v108
  %v553 = vunpack.c.l.b16 %v109
  %v554 = vunpack.c.l.b16 %v110
  %v555 = vunpack.c.l.b16 %v111
  %v556 = vunpack.c.l.b16 %v112
  %v557 = vunpack.c.l.b16 %v113
  %v558 = vunpack.c.l.b16 %v114
  %v559 = vunpack.c.l.b16 %v115
  %v560 = vunpack.c.l.b16 %v116
  %v561 = vunpack.c.l.b16 %v117
  %v562 = vunpack.c.l.b16 %v118
  %v563 = vunpack.c.l.b16 %v119
  %v564 = vunpack.c.l.b16 %v120
  %v565 = vunpack.c.l.b16 %v121
  %v566 = vunpack.c.l.b16 %v122
  %v567 = vunpack.c.l.b16 %v123
  %v568 = vunpack.c.l.b16 %v124
  %v569 = vunpack.c.l.b16 %v125
  %v570 = vunpack.c.l.b16 %v126
  %v571 = vunpack.c.l.b16 %v127
  %v572 = vunpack.c.l.b16 %v128
  %v573 = vunpack.c.l.b16 %v129
  %v574 = vunpack.c.l.b16 %v130
  %v575 = vunpack.c.l.b16 %v131
  %v576 = vunpack.c.l.b16 %v132
  %v577 = vunpack.c.l.b16 %v133
  %v578 = vunpack.c.l.b16 %v134
  %v579 = vunpack.c.l.b16 %v135
  %v580 = vunpack.c.l.b16 %v136
  %v581 = vunpack.c.l.b16 %v137
  %v582 = vunpack.c.l.b16 %v138
  %v583 = vunpack.c.l.b16 %v139
  %v584 = vunpack.c.l.b16 %v140
  %v585 = vunpack.c.l.b16 %v141
  %v586 = vunpack.c.l.b16 %v142
  %v587 = vunpack.c.l.b16 %v143
  %v588 = vunpack.c.l.b16 %v144
  %v589 = vunpack.c.l.b16 %v145
  %v590 = vunpack.c.l.b16 %v146
  %v591 = vunpack.c.l.b16 %v147
  %v592 = vunpack.c.l.b16 %v148
  %v593 = vunpack.c.l.b16 %v149
  %v594 = vunpack.c.l.b16 %v150
  %v595 = vunpack.c.l.b16 %v151
  %v596 = vunpack.c.l.b16 %v152
  %v597 = vunpack.c.l.b16 %v153
  %v598 = vunpack.c.l.b16 %v154
  %v599 = vunpack.c.l.b16 %v155
  %v600 = vunpack.c.l.b16 %v156
  %v601 = vunpack.c.l.b16 %v157
  %v602 = vunpack.c.l.b16 %v158
  %v603 = vunpack.c.l.b16 %v159
  %v604 = vunpack.c.l.b16 %v160
  %v605 = vunpack.c.l.b16 %v161
  %v606 = vunpack.c.l.b16 %v162
  %v607 = vunpack.c.l.b16 %v163
  %v608 = vunpack.c.l.b16 %v164
  %v609 = vunpack.c.l.b16 %v165
  %v610 = vunpack.c.l.b16 %v166
  %v611 = vunpack.c.l.b16 %v167
  %v612 = vunpack.c.l.b16 %v168
  %v613 = vunpack.c.l.b16 %v169
  %v614 = vunpack.c.l.b16 %v170
  %v615 = vunpack.c.l.b16 %v171
  %v616 = vunpack.c.l.b16 %v172
  %v617 = vunpack.c.l.b16 %v173
  %v618 = vunpack.c.l.b16 %v174
  %v619 = vunpack.c.l.b16 %v175
  %v620 = vunpack.c.l.b16 %v176
  %v621 = vunpack.c.l.b16 %v177
  %v622 = vunpack.c.l.b16 %v178
  %v623 = vunpack.c.l.b16 %v179
  %v624 = vunpack.c.l.b16 %v180
  %v625 = vunpack.c.l.b16 %v181
  %v626 = vunpack.c.l.b16 %v182
  %v627 = vunpack.c.l.b16 %v183
  %v628 = vunpack.c.l.b16 %v184
  %v629 = vunpack.c.l.b16 %v185
  %v630 = vunpack.c.l.b16 %v186
  %v631 = vunpack.c.l.b16 %v187
  %v632 = vunpack.c.l.b16 %v188
  %v633 = vunpack.c.l.b16 %v189
  %v634 = vunpack.c.l.b16 %v190
  %v635 = vunpack.c.l.b16 %v191
  %v636 = vunpack.c.l.b16 %v192
  %v637 = vunpack.c.l.b16 %v193
  %v638 = vunpack.c.l.b16 %v194
  %v639 = vunpack.c.l.b16 %v195
  %v640 = vunpack.c.l.b16 %v196
  %v641 = vunpack.c.l.b16 %v197
  %v642 = vunpack.c.l.b16 %v198
  %v643 = vunpack.c.l.b16 %v199
  %v644 = vunpack.c.l.b16 %v200
  %v645 = vunpack.c.l.b16 %v201
  %v646 = vunpack.c.l.b16 %v202
  %v647 = vunpack.c.l.b16 %v203
  %v648 = vunpack.c.l.b16 %v204
  %v649 = vunpack.c.l.b16 %v205
  %v650 = vunpack.c.l.b16 %v206
  %v651 = vunpack.c.l.b16 %v207
  %v652 = vunpack.c.l.b16 %v208
  %v653 = vunpack.c.l.b16 %v209
  %v654 = vunpack.c.l.b16 %v210
  %v655 = vunpack.c.l.b16 %v211
  %v656 = vunpack.c.l.b16 %v212
  %v657 = vunpack.c.l.b16 %v213
  %v658 = vunpack.c.l.b16 %v214
  %v659 = vunpack.c.l.b16 %v215
  %v660 = vunpack.c.l.b16 %v216
  %v661 = vunpack.c.l.b16 %v217
  %v662 = vpack.c.b16 %v467, %v466
  %v663 = vpack.c.b16 %v469, %v468
  %v664 = vpack.c.b16 %v471, %v470
  %v665 = vpack.c.b16 %v473, %v472
  %v666 = vpack.c.b16 %v475, %v474
  %v667 = vpack.c.b16 %v477, %v476
  %v668 = vpack.c.b16 %v479, %v478
  %v669 = vpack.c.b16 %v481, %v480
  %v670 = vpack.c.b16 %v483, %v482
  %v671 = vpack.c.b16 %v485, %v484
  %v672 = vpack.c.b16 %v487, %v486
  %v673 = vpack.c.b16 %v489, %v488
  %v674 = vpack.c.b16 %v491, %v490
  %v675 = vpack.c.b16 %v493, %v492
  %v676 = vpack.c.b16 %v495, %v494
  %v677 = vpack.c.b16 %v497, %v496
  %v678 = vpack.c.b16 %v499, %v498
  %v679 = vpack.c.b16 %v501, %v500
  %v680 = vpack.c.b16 %v503, %v502
  %v681 = vpack.c.b16 %v505, %v504
  %v682 = vpack.c.b16 %v507, %v506
  %v683 = vpack.c.b16 %v509, %v508
  %v684 = vpack.c.b16 %v511, %v510
  %v685 = vpack.c.b16 %v513, %v512
  %v686 = vpack.c.b16 %v515, %v514
  %v687 = vpack.c.b16 %v517, %v516
  %v688 = vpack.c.b16 %v519, %v518
  %v689 = vpack.c.b16 %v521, %v520
  %v690 = vpack.c.b16 %v523, %v522
  %v691 = vpack.c.b16 %v525, %v524
  %v692 = vpack.c.b16 %v527, %v526
  %v693 = vpack.c.b16 %v529, %v528
  %v694 = vpack.c.b16 %v531, %v530
  %v695 = vpack.c.b16 %v533, %v532
  %v696 = vpack.c.b16 %v535, %v534
  %v697 = vpack.c.b16 %v537, %v536
  %v698 = vpack.c.b16 %v539, %v538
  %v699 = vpack.c.b16 %v541, %v540
  %v700 = vpack.c.b16 %v543, %v542
  %v701 = vpack.c.b16 %v545, %v544
  %v702 = vpack.c.b16 %v547, %v546
  %v703 = vpack.c.b16 %v549, %v548
  %v704 = vpack.c.b16 %v551, %v550
  %v705 = vpack.c.b16 %v553, %v552
  %v706 = vpack.c.b16 %v555, %v554
  %v707 = vpack.c.b16 %v557, %v556
  %v708 = vpack.c.b16 %v559, %v558
  %v709 = vpack.c.b16 %v561, %v560
  %v710 = vpack.c.b16 %v563, %v562
  %v711 = vpack.c.b16 %v565, %v564
  %v712 = vpack.c.b16 %v567, %v566
  %v713 = vpack.c.b16 %v569, %v568
  %v714 = vpack.c.b16 %v571, %v570
  %v715 = vpack.c.b16 %v573, %v572
  %v716 = vpack.c.b16 %v575, %v574
  %v717 = vpack.c.b16 %v577, %v576
  %v718 = vpack.c.b16 %v579, %v578
  %v719 = vpack.c.b16 %v581, %v580
  %v720 = vpack.c.b16 %v583, %v582
  %v721 = vpack.c.b16 %v585, %v584
  %v722 = vpack.c.b16 %v587, %v586
  %v723 = vpack.c.b16 %v589, %v588
  %v724 = vpack.c.b16 %v591, %v590
  %v725 = vpack.c.b16 %v593, %v592
  %v726 = vpack.c.b16 %v595, %v594
  %v727 = vpack.c.b16 %v597, %v596
  %v728 = vpack.c.b16 %v599, %v598
  %v729 = vpack.c.b16 %v601, %v600
  %v730 = vpack.c.b16 %v603, %v602
  %v731 = vpack.c.b16 %v605, %v604
  %v732 = vpack.c.b16 %v607, %v606
  %v733 = vpack.c.b16 %v609, %v608
  %v734 = vpack.c.b16 %v611, %v610
  %v735 = vpack.c.b16 %v613, %v612
  %v736 = vpack.c.b16 %v615, %v614
  %v737 = vpack.c.b16 %v617, %v616
  %v738 = vpack.c.b16 %v619, %v618
  %v739 = vpack.c.b16 %v621, %v620
  %v740 = vpack.c.b16 %v623, %v622
  %v741 = vpack.c.b16 %v625, %v624
  %v742 = vpack.c.b16 %v627, %v626
  %v743 = vpack.c.b16 %v629, %v628
  %v744 = vpack.c.b16 %v631, %v630
  %v745 = vpack.c.b16 %v633, %v632
  %v746 = vpack.c.b16 %v635, %v634
  %v747 = vpack.c.b16 %v637, %v636
  %v748 = vpack.c.b16 %v639, %v638
  %v749 = vpack.c.b16 %v641, %v640
  %v750 = vpack.c.b16 %v643, %v642
  %v751 = vpack.c.b16 %v645, %v644
  %v752 = vpack.c.b16 %v647, %v646
  %v753 = vpack.c.b16 %v649, %v648
  %v754 = vpack.c.b16 %v651, %v650
  %v755 = vpack.c.b16 %v653, %v652
  %v756 = vpack.c.b16 %v655, %v654
  %v757 = vpack.c.b16 %v657, %v656
  %v758 = vpack.c.b16 %v659, %v658
  %v759 = vpack.c.b16 %v661, %v660
  %vm858 = vcmask 261120
  %v860 = vsel %vm858, %v257, 0
  %862 = vmatprep.subr.bf16.mxu0 0
  %863 = vmatpush1.bf16.msra.mxu0 %v662
  %864 = vmatprep.subr.bf16.mxu0 0
  %865 = vmatpush1.bf16.msra.mxu0 %v663
  %866 = vmatprep.subr.bf16.mxu0 0
  %867 = vmatpush1.bf16.msra.mxu0 %v664
  %868 = vmatprep.subr.bf16.mxu0 0
  %869 = vmatpush1.bf16.msra.mxu0 %v665
  %870 = vmatprep.subr.bf16.mxu0 0
  %871 = vmatpush1.bf16.msra.mxu0 %v666
  %872 = vmatprep.subr.bf16.mxu0 0
  %873 = vmatpush1.bf16.msra.mxu0 %v667
  %874 = vmatprep.subr.bf16.mxu0 0
  %875 = vmatpush1.bf16.msra.mxu0 %v668
  %876 = vmatprep.subr.bf16.mxu0 0
  %877 = vmatpush1.bf16.msra.mxu0 %v669
  %878 = vmatprep.subr.bf16.mxu0 0
  %879 = vmatpush1.bf16.msra.mxu0 %v670
  %880 = vmatprep.subr.bf16.mxu0 0
  %881 = vmatpush1.bf16.msra.mxu0 %v671
  %882 = vmatprep.subr.bf16.mxu0 0
  %883 = vmatpush1.bf16.msra.mxu0 %v672
  %884 = vmatprep.subr.bf16.mxu0 0
  %885 = vmatpush1.bf16.msra.mxu0 %v673
  %886 = vmatprep.subr.bf16.mxu0 0
  %887 = vmatpush1.bf16.msra.mxu0 %v674
  %888 = vmatprep.subr.bf16.mxu0 0
  %889 = vmatpush1.bf16.msra.mxu0 %v675
  %890 = vmatprep.subr.bf16.mxu0 0
  %891 = vmatpush1.bf16.msra.mxu0 %v676
  %892 = vmatprep.subr.bf16.mxu0 0
  %893 = vmatpush1.bf16.msra.mxu0 %v677
  %894 = vmatprep.mubr.bf16.mxu0 %v246
  %895 = vmatmul.mubr.bf16.gmra.mrb[0].mxu0 %v245
  %v896 = vpop.f32.mrb[0].mxu0
  %v897 = vadd.f32 %v223, %v896
  %v898 = vpop.f32.mrb[0].mxu0
  %v899 = vpop.f32.mrb[0].mxu0
  %v900 = vpop.f32.mrb[0].mxu0
  %901 = vdwg.mxu0
  %902 = vmatprep.subr.bf16.mxu0 0
  %903 = vmatpush1.bf16.msra.mxu0 %v678
  %904 = vmatprep.subr.bf16.mxu0 0
  %905 = vmatpush1.bf16.msra.mxu0 %v679
  %906 = vmatprep.subr.bf16.mxu0 0
  %907 = vmatpush1.bf16.msra.mxu0 %v680
  %908 = vmatprep.subr.bf16.mxu0 0
  %909 = vmatpush1.bf16.msra.mxu0 %v681
  %910 = vmatprep.subr.bf16.mxu0 0
  %911 = vmatpush1.bf16.msra.mxu0 %v682
  %912 = vmatprep.subr.bf16.mxu0 0
  %913 = vmatpush1.bf16.msra.mxu0 %v683
  %914 = vmatprep.subr.bf16.mxu0 0
  %915 = vmatpush1.bf16.msra.mxu0 %v684
  %916 = vmatprep.subr.bf16.mxu0 0
  %917 = vmatpush1.bf16.msra.mxu0 %v685
  %918 = vmatprep.subr.bf16.mxu0 0
  %919 = vmatpush1.bf16.msra.mxu0 %v686
  %920 = vmatprep.subr.bf16.mxu0 0
  %921 = vmatpush1.bf16.msra.mxu0 %v687
  %922 = vmatprep.subr.bf16.mxu0 0
  %923 = vmatpush1.bf16.msra.mxu0 %v688
  %924 = vmatprep.subr.bf16.mxu0 0
  %925 = vmatpush1.bf16.msra.mxu0 %v689
  %926 = vmatprep.subr.bf16.mxu0 0
  %927 = vmatpush1.bf16.msra.mxu0 %v690
  %928 = vmatprep.subr.bf16.mxu0 0
  %929 = vmatpush1.bf16.msra.mxu0 %v691
  %930 = vmatprep.subr.bf16.mxu0 0
  %931 = vmatpush1.bf16.msra.mxu0 %v692
  %932 = vmatprep.subr.bf16.mxu0 0
  %933 = vmatpush1.bf16.msra.mxu0 %v693
  %934 = vmatprep.mubr.bf16.mxu0 %v248
  %935 = vmatmul.mubr.bf16.gmra.mrb[0].mxu0 %v247
  %v936 = vpop.f32.mrb[0].mxu0
  %v937 = vadd.f32 %v897, %v936
  %v938 = vpop.f32.mrb[0].mxu0
  %v939 = vpop.f32.mrb[0].mxu0
  %v940 = vpop.f32.mrb[0].mxu0
  %941 = vdwg.mxu0
  %942 = vmatprep.subr.bf16.mxu0 0
  %943 = vmatpush1.bf16.msra.mxu0 %v694
  %944 = vmatprep.subr.bf16.mxu0 0
  %945 = vmatpush1.bf16.msra.mxu0 %v695
  %946 = vmatprep.subr.bf16.mxu0 0
  %947 = vmatpush1.bf16.msra.mxu0 %v696
  %948 = vmatprep.subr.bf16.mxu0 0
  %949 = vmatpush1.bf16.msra.mxu0 %v697
  %950 = vmatprep.subr.bf16.mxu0 0
  %951 = vmatpush1.bf16.msra.mxu0 %v698
  %952 = vmatprep.subr.bf16.mxu0 0
  %953 = vmatpush1.bf16.msra.mxu0 %v699
  %954 = vmatprep.subr.bf16.mxu0 0
  %955 = vmatpush1.bf16.msra.mxu0 %v700
  %956 = vmatprep.subr.bf16.mxu0 0
  %957 = vmatpush1.bf16.msra.mxu0 %v701
  %958 = vmatprep.subr.bf16.mxu0 0
  %959 = vmatpush1.bf16.msra.mxu0 %v702
  %960 = vmatprep.subr.bf16.mxu0 0
  %961 = vmatpush1.bf16.msra.mxu0 %v703
  %962 = vmatprep.subr.bf16.mxu0 0
  %963 = vmatpush1.bf16.msra.mxu0 %v704
  %964 = vmatprep.subr.bf16.mxu0 0
  %965 = vmatpush1.bf16.msra.mxu0 %v705
  %966 = vmatprep.subr.bf16.mxu0 0
  %967 = vmatpush1.bf16.msra.mxu0 %v706
  %968 = vmatprep.subr.bf16.mxu0 0
  %969 = vmatpush1.bf16.msra.mxu0 %v707
  %970 = vmatprep.subr.bf16.mxu0 0
  %971 = vmatpush1.bf16.msra.mxu0 %v708
  %972 = vmatprep.subr.bf16.mxu0 0
  %973 = vmatpush1.bf16.msra.mxu0 %v709
  %974 = vmatprep.mubr.bf16.mxu0 %v250
  %975 = vmatmul.mubr.bf16.gmra.mrb[0].mxu0 %v249
  %v976 = vpop.f32.mrb[0].mxu0
  %v977 = vadd.f32 %v937, %v976
  %v978 = vpop.f32.mrb[0].mxu0
  %v979 = vpop.f32.mrb[0].mxu0
  %v980 = vpop.f32.mrb[0].mxu0
  %981 = vdwg.mxu0
  %982 = vmatprep.subr.bf16.mxu0 0
  %983 = vmatpush1.bf16.msra.mxu0 %v710
  %984 = vmatprep.subr.bf16.mxu0 0
  %985 = vmatpush1.bf16.msra.mxu0 %v711
  %986 = vmatprep.subr.bf16.mxu0 0
  %987 = vmatpush1.bf16.msra.mxu0 %v712
  %988 = vmatprep.subr.bf16.mxu0 0
  %989 = vmatpush1.bf16.msra.mxu0 %v713
  %990 = vmatprep.subr.bf16.mxu0 0
  %991 = vmatpush1.bf16.msra.mxu0 %v714
  %992 = vmatprep.subr.bf16.mxu0 0
  %993 = vmatpush1.bf16.msra.mxu0 %v715
  %994 = vmatprep.subr.bf16.mxu0 0
  %995 = vmatpush1.bf16.msra.mxu0 %v716
  %996 = vmatprep.subr.bf16.mxu0 0
  %997 = vmatpush1.bf16.msra.mxu0 %v717
  %998 = vmatprep.subr.bf16.mxu0 0
  %999 = vmatpush1.bf16.msra.mxu0 %v718
  %1000 = vmatprep.subr.bf16.mxu0 0
  %1001 = vmatpush1.bf16.msra.mxu0 %v719
  %1002 = vmatprep.subr.bf16.mxu0 0
  %1003 = vmatpush1.bf16.msra.mxu0 %v720
  %1004 = vmatprep.subr.bf16.mxu0 0
  %1005 = vmatpush1.bf16.msra.mxu0 %v721
  %1006 = vmatprep.subr.bf16.mxu0 0
  %1007 = vmatpush1.bf16.msra.mxu0 %v722
  %1008 = vmatprep.subr.bf16.mxu0 0
  %1009 = vmatpush1.bf16.msra.mxu0 %v723
  %1010 = vmatprep.subr.bf16.mxu0 0
  %1011 = vmatpush1.bf16.msra.mxu0 %v724
  %1012 = vmatprep.subr.bf16.mxu0 0
  %1013 = vmatpush1.bf16.msra.mxu0 %v725
  %1014 = vmatprep.mubr.bf16.mxu0 %v252
  %1015 = vmatmul.mubr.bf16.gmra.mrb[0].mxu0 %v251
  %v1016 = vpop.f32.mrb[0].mxu0
  %v1017 = vadd.f32 %v977, %v1016
  %v1018 = vpop.f32.mrb[0].mxu0
  %v1019 = vpop.f32.mrb[0].mxu0
  %v1020 = vpop.f32.mrb[0].mxu0
  %1021 = vdwg.mxu0
  %1022 = vmatprep.subr.bf16.mxu0 0
  %1023 = vmatpush1.bf16.msra.mxu0 %v726
  %1024 = vmatprep.subr.bf16.mxu0 0
  %1025 = vmatpush1.bf16.msra.mxu0 %v727
  %1026 = vmatprep.subr.bf16.mxu0 0
  %1027 = vmatpush1.bf16.msra.mxu0 %v728
  %1028 = vmatprep.subr.bf16.mxu0 0
  %1029 = vmatpush1.bf16.msra.mxu0 %v729
  %1030 = vmatprep.subr.bf16.mxu0 0
  %1031 = vmatpush1.bf16.msra.mxu0 %v730
  %1032 = vmatprep.subr.bf16.mxu0 0
  %1033 = vmatpush1.bf16.msra.mxu0 %v731
  %1034 = vmatprep.subr.bf16.mxu0 0
  %1035 = vmatpush1.bf16.msra.mxu0 %v732
  %1036 = vmatprep.subr.bf16.mxu0 0
  %1037 = vmatpush1.bf16.msra.mxu0 %v733
  %1038 = vmatprep.subr.bf16.mxu0 0
  %1039 = vmatpush1.bf16.msra.mxu0 %v734
  %1040 = vmatprep.subr.bf16.mxu0 0
  %1041 = vmatpush1.bf16.msra.mxu0 %v735
  %1042 = vmatprep.subr.bf16.mxu0 0
  %1043 = vmatpush1.bf16.msra.mxu0 %v736
  %1044 = vmatprep.subr.bf16.mxu0 0
  %1045 = vmatpush1.bf16.msra.mxu0 %v737
  %1046 = vmatprep.subr.bf16.mxu0 0
  %1047 = vmatpush1.bf16.msra.mxu0 %v738
  %1048 = vmatprep.subr.bf16.mxu0 0
  %1049 = vmatpush1.bf16.msra.mxu0 %v739
  %1050 = vmatprep.subr.bf16.mxu0 0
  %1051 = vmatpush1.bf16.msra.mxu0 %v740
  %1052 = vmatprep.subr.bf16.mxu0 0
  %1053 = vmatpush1.bf16.msra.mxu0 %v741
  %1054 = vmatprep.mubr.bf16.mxu0 %v254
  %1055 = vmatmul.mubr.bf16.gmra.mrb[0].mxu0 %v253
  %v1056 = vpop.f32.mrb[0].mxu0
  %v1057 = vadd.f32 %v1017, %v1056
  %v1058 = vpop.f32.mrb[0].mxu0
  %v1059 = vpop.f32.mrb[0].mxu0
  %v1060 = vpop.f32.mrb[0].mxu0
  %1061 = vdwg.mxu0
  %1062 = vmatprep.subr.bf16.mxu0 0
  %1063 = vmatpush1.bf16.msra.mxu0 %v742
  %1064 = vmatprep.subr.bf16.mxu0 0
  %1065 = vmatpush1.bf16.msra.mxu0 %v743
  %1066 = vmatprep.subr.bf16.mxu0 0
  %1067 = vmatpush1.bf16.msra.mxu0 %v744
  %1068 = vmatprep.subr.bf16.mxu0 0
  %1069 = vmatpush1.bf16.msra.mxu0 %v745
  %1070 = vmatprep.subr.bf16.mxu0 0
  %1071 = vmatpush1.bf16.msra.mxu0 %v746
  %1072 = vmatprep.subr.bf16.mxu0 0
  %1073 = vmatpush1.bf16.msra.mxu0 %v747
  %1074 = vmatprep.subr.bf16.mxu0 0
  %1075 = vmatpush1.bf16.msra.mxu0 %v748
  %1076 = vmatprep.subr.bf16.mxu0 0
  %1077 = vmatpush1.bf16.msra.mxu0 %v749
  %1078 = vmatprep.subr.bf16.mxu0 0
  %1079 = vmatpush1.bf16.msra.mxu0 %v750
  %1080 = vmatprep.subr.bf16.mxu0 0
  %1081 = vmatpush1.bf16.msra.mxu0 %v751
  %1082 = vmatprep.subr.bf16.mxu0 0
  %1083 = vmatpush1.bf16.msra.mxu0 %v752
  %1084 = vmatprep.subr.bf16.mxu0 0
  %1085 = vmatpush1.bf16.msra.mxu0 %v753
  %1086 = vmatprep.subr.bf16.mxu0 0
  %1087 = vmatpush1.bf16.msra.mxu0 %v754
  %1088 = vmatprep.subr.bf16.mxu0 0
  %1089 = vmatpush1.bf16.msra.mxu0 %v755
  %1090 = vmatprep.subr.bf16.mxu0 0
  %1091 = vmatpush1.bf16.msra.mxu0 %v756
  %1092 = vmatprep.subr.bf16.mxu0 0
  %1093 = vmatpush1.bf16.msra.mxu0 %v757
  %1094 = vmatprep.mubr.bf16.mxu0 %v256
  %1095 = vmatmul.mubr.bf16.gmra.mrb[0].mxu0 %v255
  %v1096 = vpop.f32.mrb[0].mxu0
  %v1097 = vadd.f32 %v1057, %v1096
  %v1098 = vpop.f32.mrb[0].mxu0
  %v1099 = vpop.f32.mrb[0].mxu0
  %v1100 = vpop.f32.mrb[0].mxu0
  %1101 = vdwg.mxu0
  %1102 = vmatprep.subr.bf16.mxu0 0
  %1103 = vmatpush1.bf16.msra.mxu0 %v758
  %1104 = vmatprep.subr.bf16.mxu0 0
  %1105 = vmatpush1.bf16.msra.mxu0 %v759
  %1106 = vmatprep.subr.bf16.mxu0 0
  %1107 = vmatpush1.bf16.msra.mxu0 0
  %1108 = vmatprep.subr.bf16.mxu0 0
  %1109 = vmatpush1.bf16.msra.mxu0 0
  %1110 = vmatprep.subr.bf16.mxu0 0
  %1111 = vmatpush1.bf16.msra.mxu0 0
  %1112 = vmatprep.subr.bf16.mxu0 0
  %1113 = vmatpush1.bf16.msra.mxu0 0
  %1114 = vmatprep.subr.bf16.mxu0 0
  %1115 = vmatpush1.bf16.msra.mxu0 0
  %1116 = vmatprep.subr.bf16.mxu0 0
  %1117 = vmatpush1.bf16.msra.mxu0 0
  %1118 = vmatprep.subr.bf16.mxu0 0
  %1119 = vmatpush1.bf16.msra.mxu0 0
  %1120 = vmatprep.subr.bf16.mxu0 0
  %1121 = vmatpush1.bf16.msra.mxu0 0
  %1122 = vmatprep.subr.bf16.mxu0 0
  %1123 = vmatpush1.bf16.msra.mxu0 0
  %1124 = vmatprep.subr.bf16.mxu0 0
  %1125 = vmatpush1.bf16.msra.mxu0 0
  %1126 = vmatprep.subr.bf16.mxu0 0
  %1127 = vmatpush1.bf16.msra.mxu0 0
  %1128 = vmatprep.subr.bf16.mxu0 0
  %1129 = vmatpush1.bf16.msra.mxu0 0
  %1130 = vmatprep.subr.bf16.mxu0 0
  %1131 = vmatpush1.bf16.msra.mxu0 0
  %1132 = vmatprep.subr.bf16.mxu0 0
  %1133 = vmatpush1.bf16.msra.mxu0 0
  %1134 = vmatprep.mubr.bf16.mxu0 0
  %1135 = vmatmul.mubr.bf16.gmra.mrb[0].mxu0 %v860
  %v1136 = vpop.f32.mrb[0].mxu0
  %v1137 = vadd.f32 %v1097, %v1136
  %v1138 = vpop.f32.mrb[0].mxu0
  %v1139 = vpop.f32.mrb[0].mxu0
  %v1140 = vpop.f32.mrb[0].mxu0
  %1141 = vdwg.mxu0
  %1142 = vst [vmem:[%s3] sm:$0xff] %v1137
  // Predicated region
  $region14: #{cnn_forward.5} parent=0 // pred_check
    _
  $region15: #{cnn_forward.5} parent=0 // pred_check_branch
    %1144 = sbr.rel (0) target = $region17
  $region16: #{cnn_forward.5} parent=0 // pred_region
    _
  $region17: #{cnn_forward.5} parent=0 // pred_fallthru
    _
  // Predicated region
  $region18: #{cnn_forward.5} parent=0 // pred_check
    _
  $region19: #{cnn_forward.5} parent=0 // pred_check_branch
    %1146 = sbr.rel (0) target = $region21
  $region20: #{cnn_forward.5} parent=0 // pred_region
    _
  $region21: #{cnn_forward.5} parent=0 // pred_fallthru
    _

</llo_original>
